<compile_context>
chip_gen: v6e
topology: v6e:2x2x1
jax: 0.10.0
libtpu: 0.0.40
codegen_flags: <defaults>
</compile_context>

<pallas_src>
import functools

import jax
import jax.numpy as jnp
from jax import lax
from jax.experimental import pallas as pl
from jax.experimental.pallas import tpu as pltpu

EPS = 1e-5

# Explicit scoped-VMEM cap; blocks here are KBs so this is only a safe ceiling that
# also holds on v7x (64 MiB physical).
_VMEM_LIMIT = 32 * 1024 * 1024


# ---------------- activation ----------------

def _mish(x):
    # mish(x) = x * tanh(softplus(x)) = x * u / (u + 2), u = e^x * (e^x + 2).
    # One exp + one reciprocal per element (vs exp + log1p + tanh): ~3x fewer EUP pushes.
    t = jnp.exp(jnp.minimum(x, 20.0))
    u = t * (t + 2.0)
    return x * u * pl.reciprocal(u + 2.0, approx=False)


def _mish_ref(x):
    sp = jnp.where(x > 20.0, x, jnp.log1p(jnp.exp(jnp.minimum(x, 20.0))))
    return x * jnp.tanh(sp)


# ---------------- pass 1: 1x1 conv + BN1 partial stats ----------------

def _conv1_stats_kernel(x_ref, w1_ref, h_ref, s_ref, ss_ref):
    # (Cmid, C) @ (C, HW) -> (Cmid, HW): channels on sublanes, pixels on lanes.
    # Lane-dense store of hid; per-image BN1 sum / sum-sq via lane (XLU) reductions.
    h = jnp.dot(w1_ref[...], x_ref[...], preferred_element_type=jnp.float32)
    h_ref[...] = h.astype(h_ref.dtype)
    s_ref[...] = jnp.sum(h, axis=1, keepdims=True)
    ss_ref[...] = jnp.sum(h * h, axis=1, keepdims=True)


def _call_conv1_stats(x3, w1m, mm_dtype):
    n, c, hw = x3.shape
    cmid = w1m.shape[0]
    return pl.pallas_call(
        _conv1_stats_kernel,
        grid=(n,),
        in_specs=[
            pl.BlockSpec((None, c, hw), lambda b: (b, 0, 0)),
            pl.BlockSpec((cmid, c), lambda b: (0, 0)),
        ],
        out_specs=[
            pl.BlockSpec((None, cmid, hw), lambda b: (b, 0, 0)),
            pl.BlockSpec((None, cmid, 1), lambda b: (b, 0, 0)),   # per-image BN1 sum
            pl.BlockSpec((None, cmid, 1), lambda b: (b, 0, 0)),   # per-image BN1 sum-sq
        ],
        out_shape=[
            jax.ShapeDtypeStruct((n, cmid, hw), mm_dtype),
            jax.ShapeDtypeStruct((n, cmid, 1), jnp.float32),
            jax.ShapeDtypeStruct((n, cmid, 1), jnp.float32),
        ],
        compiler_params=pltpu.CompilerParams(
            dimension_semantics=("parallel",),     # per-image partials -> megacore OK
            vmem_limit_bytes=_VMEM_LIMIT,
        ),
    )(x3, w1m)


# ---------------- pass 2: BN1-apply + Mish + 3x3 conv + BN2 partial stats ----------------

def _make_conv2_kernel(hh, ww):
    hw = hh * ww

    def kernel(h_ref, w2_ref, a1_ref, b1_ref, y_ref, s_ref, ss_ref):
        cmid = h_ref.shape[0]

        # Fused BN1-apply + Mish on the whole image: (Cmid, HW), f32 epilogue.
        act = _mish(h_ref[...].astype(jnp.float32) * a1_ref[...] + b1_ref[...])

        # Zero-pad the flattened pixel axis so every 3x3 tap is a static lane slice.
        # (pltpu.roll on the XLU is the alternative at larger widths.)
        zpad = jnp.zeros((cmid, ww + 1), jnp.float32)
        pad = jnp.concatenate([zpad, act, zpad], axis=1)        # (Cmid, HW + 2W + 2)

        # Row / column boundary masks (SAME padding) for the flattened layout.
        pos = lax.broadcasted_iota(jnp.int32, (cmid, hw), 1)
        col_id = pos % ww
        not_first_col = col_id != 0
        not_last_col = col_id != (ww - 1)
        not_first_row = pos >= ww
        not_last_row = pos < (hw - ww)

        taps = []
        for ky in range(3):
            for kx in range(3):
                d = (ky - 1) * ww + (kx - 1)
                t = pad[:, (ww + 1) + d:(ww + 1) + d + hw]      # act at (h+ky-1, w+kx-1)
                if ky == 0:
                    t = jnp.where(not_first_row, t, 0.0)
                elif ky == 2:
                    t = jnp.where(not_last_row, t, 0.0)
                if kx == 0:
                    t = jnp.where(not_first_col, t, 0.0)
                elif kx == 2:
                    t = jnp.where(not_last_col, t, 0.0)
                taps.append(t)

        # Single MXU matmul for the whole image: (C, 9*Cmid) @ (9*Cmid, HW).
        col = jnp.concatenate(taps, axis=0).astype(w2_ref.dtype)
        y = jnp.dot(w2_ref[...], col, preferred_element_type=jnp.float32)   # (C, HW)

        y_ref[...] = y                                           # lane-dense store
        s_ref[...] = jnp.sum(y, axis=1, keepdims=True)           # per-image BN2 partials
        ss_ref[...] = jnp.sum(y * y, axis=1, keepdims=True)

    return kernel


def _call_conv2_stats(h3, w2m, a1, b1, hh, ww):
    n, cmid, hw = h3.shape
    c = w2m.shape[0]
    return pl.pallas_call(
        _make_conv2_kernel(hh, ww),
        grid=(n,),
        in_specs=[
            pl.BlockSpec((None, cmid, hw), lambda b: (b, 0, 0)),
            pl.BlockSpec((c, 9 * cmid), lambda b: (0, 0)),
            pl.BlockSpec((cmid, 1), lambda b: (0, 0)),
            pl.BlockSpec((cmid, 1), lambda b: (0, 0)),
        ],
        out_specs=[
            pl.BlockSpec((None, c, hw), lambda b: (b, 0, 0)),
            pl.BlockSpec((None, c, 1), lambda b: (b, 0, 0)),
            pl.BlockSpec((None, c, 1), lambda b: (b, 0, 0)),
        ],
        out_shape=[
            jax.ShapeDtypeStruct((n, c, hw), jnp.float32),
            jax.ShapeDtypeStruct((n, c, 1), jnp.float32),
            jax.ShapeDtypeStruct((n, c, 1), jnp.float32),
        ],
        compiler_params=pltpu.CompilerParams(
            dimension_semantics=("parallel",),
            vmem_limit_bytes=_VMEM_LIMIT,
        ),
    )(h3, w2m, a1, b1)


# ---------------- pass 3: BN2-apply + Mish + residual ----------------

def _bn2_mish_res_kernel(y_ref, x_ref, a2_ref, b2_ref, o_ref):
    ybn = y_ref[...] * a2_ref[...] + b2_ref[...]
    o_ref[...] = x_ref[...].astype(jnp.float32) + _mish(ybn)


def _call_bn2_mish_res(y3, x3, a2, b2):
    n, c, hw = y3.shape
    return pl.pallas_call(
        _bn2_mish_res_kernel,
        grid=(n,),
        in_specs=[
            pl.BlockSpec((None, c, hw), lambda b: (b, 0, 0)),
            pl.BlockSpec((None, c, hw), lambda b: (b, 0, 0)),
            pl.BlockSpec((c, 1), lambda b: (0, 0)),
            pl.BlockSpec((c, 1), lambda b: (0, 0)),
        ],
        out_specs=pl.BlockSpec((None, c, hw), lambda b: (b, 0, 0)),
        out_shape=jax.ShapeDtypeStruct((n, c, hw), jnp.float32),
        # Reuse the conv-2 output buffer (a Pallas intermediate, never the user's
        # input) as the result buffer.
        input_output_aliases={0: 0},
        compiler_params=pltpu.CompilerParams(
            dimension_semantics=("parallel",),
            vmem_limit_bytes=_VMEM_LIMIT,
        ),
    )(y3, x3, a2, b2)


# ---------------- wrapper ----------------

def res_residual_block(x_nchw, params, mm_dtype=jnp.float32):
    n, c, hh, ww = x_nchw.shape
    cmid = c // 2
    hw = hh * ww
    nhw = n * hw

    # NCHW-native: channels ride the sublane axis, flattened H*W rides the lane axis.
    # Only a free reshape at the boundary -> no NCHW<->NHWC HBM transposes.
    x3 = x_nchw.reshape(n, c, hw)

    w1m = params["w1"].astype(mm_dtype)                                   # (Cmid, C)
    # (3,3,Cmid,C) HWIO -> (C, 9*Cmid), tap-major, matching the kernel's col build.
    w2m = jnp.transpose(params["w2"], (3, 0, 1, 2)).reshape(c, 9 * cmid).astype(mm_dtype)

    # ---- pass 1: 1x1 conv + BN1 per-image partial sums ----------------------
    h3, s1, ss1 = _call_conv1_stats(x3.astype(mm_dtype), w1m, mm_dtype)
    s1 = jnp.sum(s1, axis=0)                                              # (Cmid, 1)
    ss1 = jnp.sum(ss1, axis=0)
    mu1 = s1 / nhw
    var1 = jnp.maximum(ss1 / nhw - mu1 * mu1, 0.0)                        # biased variance
    a1 = params["g1"] * lax.rsqrt(var1 + EPS)                             # (Cmid, 1) scale
    b1 = params["b1"] - mu1 * a1                                          # (Cmid, 1) shift

    # ---- pass 2: fused BN1-apply + Mish + 3x3 conv + BN2 partial sums -------
    y3, s2, ss2 = _call_conv2_stats(h3, w2m, a1, b1, hh, ww)
    s2 = jnp.sum(s2, axis=0)                                              # (C, 1)
    ss2 = jnp.sum(ss2, axis=0)
    mu2 = s2 / nhw
    var2 = jnp.maximum(ss2 / nhw - mu2 * mu2, 0.0)
    a2 = params["g2"] * lax.rsqrt(var2 + EPS)
    b2 = params["b2"] - mu2 * a2

    # ---- pass 3: BN2-apply + Mish + residual (lane-dense, aliased) ----------
    out3 = _call_bn2_mish_res(y3, x3, a2, b2)
    return out3.reshape(n, c, hh, ww)


# ---------------- pure-JAX reference for verification ----------------

def _reference(x_nchw, params):
    n, c, h, w = x_nchw.shape
    cmid = c // 2
    x = jnp.transpose(x_nchw, (0, 2, 3, 1))

    def bn(y, g, b):
        mu = jnp.mean(y, axis=(0, 1, 2), keepdims=True)
        var = jnp.mean((y - mu) ** 2, axis=(0, 1, 2), keepdims=True)
        return (y - mu) * lax.rsqrt(var + EPS) * g.reshape(1, 1, 1, -1) + b.reshape(1, 1, 1, -1)

    dn = ("NHWC", "HWIO", "NHWC")
    w1_hwio = jnp.transpose(params["w1"]).reshape(1, 1, c, cmid)
    h1 = lax.conv_general_dilated(x, w1_hwio, (1, 1), "SAME", dimension_numbers=dn)
    h1 = _mish_ref(bn(h1, params["g1"], params["b1"]))
    y = lax.conv_general_dilated(h1, params["w2"], (1, 1), "SAME", dimension_numbers=dn)
    y = _mish_ref(bn(y, params["g2"], params["b2"]))
    return jnp.transpose(x + y, (0, 3, 1, 2))


# ---------------- deterministic parameter init ----------------

def init_params(key, c):
    cmid = c // 2
    k1, k2, k3, k4, k5, k6 = jax.random.split(key, 6)
    return {
        # conv1.weight (PyTorch (Cmid, C, 1, 1)) stored as (Cmid, C)
        "w1": 0.2 * jax.random.normal(k1, (cmid, c), jnp.float32),
        # conv2.weight (PyTorch (C, Cmid, 3, 3)) stored HWIO: (3, 3, Cmid, C)
        "w2": 0.2 * jax.random.normal(k2, (3, 3, cmid, c), jnp.float32),
        # BatchNorm affine params (gamma, beta), shaped (channels, 1) for the
        # channel-in-sublane layout used by the kernels.
        "g1": 1.0 + 0.1 * jax.random.normal(k3, (cmid, 1), jnp.float32),
        "b1": 0.1 * jax.random.normal(k4, (cmid, 1), jnp.float32),
        "g2": 1.0 + 0.1 * jax.random.normal(k5, (c, 1), jnp.float32),
        "b2": 0.1 * jax.random.normal(k6, (c, 1), jnp.float32),
    }


if __name__ == "__main__":
    key = jax.random.PRNGKey(0)
    kx, kp = jax.random.split(key)

    N, C, H, W = 2, 8, 16, 16            # nin = 8 -> nin // 2 = 4
    x = jax.random.normal(kx, (N, C, H, W), jnp.float32)
    params = init_params(kp, C)

    # f32 path: exact check against the f32 XLA reference.
    fwd = jax.jit(res_residual_block)
    out = jax.block_until_ready(fwd(x, params))
    ref = jax.block_until_ready(_reference(x, params))
    assert out.shape == (N, C, H, W)
    err = float(jnp.max(jnp.abs(out - ref)))
    assert jnp.allclose(out, ref, rtol=1e-4, atol=1e-4), err

    # bf16 MXU path (production setting for v5e/v6e/v7x): ~2x MXU rate and half the
    # hid-tensor HBM bytes; f32 accumulation / BN stats / epilogues. Loose check only.
    fwd_bf16 = jax.jit(functools.partial(res_residual_block, mm_dtype=jnp.bfloat16))
    out_bf16 = jax.block_until_ready(fwd_bf16(x, params))
    err_bf16 = float(jnp.max(jnp.abs(out_bf16 - ref)))
    assert err_bf16 < 0.25, err_bf16

    print("KERNEL_OK")
</pallas_src>

<mosaic_0001>
module attributes {stable_mosaic.version = 11 : i64} {
  func.func @_conv1_stats_kernel(%arg0: i32, %arg1: memref<1x8x256xf32, #tpu.memory_space<vmem>>, %arg2: memref<4x8xf32, #tpu.memory_space<vmem>>, %arg3: memref<1x4x256xf32, #tpu.memory_space<vmem>>, %arg4: memref<1x4x1xf32, #tpu.memory_space<vmem>>, %arg5: memref<1x4x1xf32, #tpu.memory_space<vmem>>) attributes {dimension_semantics = [#tpu.dimension_semantics<parallel>], iteration_bounds = array<i64: 2>, scalar_prefetch = 0 : i64, scratch_operands = 0 : i64, tpu.core_type = #tpu.core_type<tc>, window_params = [{transform_indices = @transform_0, window_bounds = array<i64: 1, 8, 256>}, {pipeline_mode = #tpu.pipeline_mode<synchronous>, transform_indices = @transform_1, window_bounds = array<i64: 4, 8>}, {transform_indices = @transform_2, window_bounds = array<i64: 1, 4, 256>}, {transform_indices = @transform_3, window_bounds = array<i64: 1, 4, 1>}, {transform_indices = @transform_4, window_bounds = array<i64: 1, 4, 1>}]} {
    %c0 = arith.constant 0 : index
    %c0_0 = arith.constant 0 : index
    %0 = vector.load %arg2[%c0, %c0_0] : memref<4x8xf32, #tpu.memory_space<vmem>>, vector<4x8xf32>
    %c0_1 = arith.constant 0 : index
    %c0_2 = arith.constant 0 : index
    %c0_3 = arith.constant 0 : index
    %1 = vector.load %arg1[%c0_1, %c0_2, %c0_3] : memref<1x8x256xf32, #tpu.memory_space<vmem>>, vector<1x8x256xf32>
    %2 = vector.shape_cast %1 : vector<1x8x256xf32> to vector<8x256xf32>
    %cst = arith.constant dense<0.000000e+00> : vector<4x256xf32>
    %3 = tpu.matmul %0, %2, %cst {dimension_numbers = #tpu.dot_dimension_numbers<[1], [0], [0], [1], [0, 0, 1, 1], [], []>} : vector<4x8xf32>, vector<8x256xf32>, vector<4x256xf32> -> vector<4x256xf32>
    %c0_4 = arith.constant 0 : index
    %c0_5 = arith.constant 0 : index
    %c0_6 = arith.constant 0 : index
    %4 = vector.load %arg3[%c0_4, %c0_5, %c0_6] : memref<1x4x256xf32, #tpu.memory_space<vmem>>, vector<1x4x256xf32>
    %5 = vector.shape_cast %4 : vector<1x4x256xf32> to vector<4x256xf32>
    %6 = vector.shape_cast %3 : vector<4x256xf32> to vector<1x4x256xf32>
    tpu.vector_store %arg3[%c0_4, %c0_5, %c0_6], %6 {strides = array<i32>} : memref<1x4x256xf32, #tpu.memory_space<vmem>>, vector<1x4x256xf32>,
    %cst_7 = arith.constant dense<0.000000e+00> : vector<4xf32>
    %7 = vector.multi_reduction <add>, %3, %cst_7 [1] : vector<4x256xf32> to vector<4xf32>
    %8 = vector.shape_cast %7 : vector<4xf32> to vector<4x1xf32>
    %c0_8 = arith.constant 0 : index
    %c0_9 = arith.constant 0 : index
    %c0_10 = arith.constant 0 : index
    %9 = vector.load %arg4[%c0_8, %c0_9, %c0_10] : memref<1x4x1xf32, #tpu.memory_space<vmem>>, vector<1x4x1xf32>
    %10 = vector.shape_cast %9 : vector<1x4x1xf32> to vector<4x1xf32>
    %11 = vector.shape_cast %8 : vector<4x1xf32> to vector<1x4x1xf32>
    tpu.vector_store %arg4[%c0_8, %c0_9, %c0_10], %11 {strides = array<i32>} : memref<1x4x1xf32, #tpu.memory_space<vmem>>, vector<1x4x1xf32>,
    %12 = arith.mulf %3, %3 : vector<4x256xf32>
    %cst_11 = arith.constant dense<0.000000e+00> : vector<4xf32>
    %13 = vector.multi_reduction <add>, %12, %cst_11 [1] : vector<4x256xf32> to vector<4xf32>
    %14 = vector.shape_cast %13 : vector<4xf32> to vector<4x1xf32>
    %c0_12 = arith.constant 0 : index
    %c0_13 = arith.constant 0 : index
    %c0_14 = arith.constant 0 : index
    %15 = vector.load %arg5[%c0_12, %c0_13, %c0_14] : memref<1x4x1xf32, #tpu.memory_space<vmem>>, vector<1x4x1xf32>
    %16 = vector.shape_cast %15 : vector<1x4x1xf32> to vector<4x1xf32>
    %17 = vector.shape_cast %14 : vector<4x1xf32> to vector<1x4x1xf32>
    tpu.vector_store %arg5[%c0_12, %c0_13, %c0_14], %17 {strides = array<i32>} : memref<1x4x1xf32, #tpu.memory_space<vmem>>, vector<1x4x1xf32>,
    return
  }
  func.func @transform_0(%arg0: i32) -> (i32, i32, i32) {
    %c0_i32 = arith.constant 0 : i32
    %c0_i32_0 = arith.constant 0 : i32
    %c0_i32_1 = arith.constant 0 : i32
    return %arg0, %c0_i32, %c0_i32_0 : i32, i32, i32
  }
  func.func @transform_1(%arg0: i32) -> (i32, i32) {
    %c0_i32 = arith.constant 0 : i32
    %c0_i32_0 = arith.constant 0 : i32
    %c0_i32_1 = arith.constant 0 : i32
    return %c0_i32, %c0_i32_0 : i32, i32
  }
  func.func @transform_2(%arg0: i32) -> (i32, i32, i32) {
    %c0_i32 = arith.constant 0 : i32
    %c0_i32_0 = arith.constant 0 : i32
    %c0_i32_1 = arith.constant 0 : i32
    return %arg0, %c0_i32, %c0_i32_0 : i32, i32, i32
  }
  func.func @transform_3(%arg0: i32) -> (i32, i32, i32) {
    %c0_i32 = arith.constant 0 : i32
    %c0_i32_0 = arith.constant 0 : i32
    %c0_i32_1 = arith.constant 0 : i32
    return %arg0, %c0_i32, %c0_i32_0 : i32, i32, i32
  }
  func.func @transform_4(%arg0: i32) -> (i32, i32, i32) {
    %c0_i32 = arith.constant 0 : i32
    %c0_i32_0 = arith.constant 0 : i32
    %c0_i32_1 = arith.constant 0 : i32
    return %arg0, %c0_i32, %c0_i32_0 : i32, i32, i32
  }
}

module attributes {stable_mosaic.version = 11 : i64} {
  func.func @kernel(%arg0: i32, %arg1: memref<1x4x256xf32, #tpu.memory_space<vmem>>, %arg2: memref<8x36xf32, #tpu.memory_space<vmem>>, %arg3: memref<4x1xf32, #tpu.memory_space<vmem>>, %arg4: memref<4x1xf32, #tpu.memory_space<vmem>>, %arg5: memref<1x8x256xf32, #tpu.memory_space<vmem>>, %arg6: memref<1x8x1xf32, #tpu.memory_space<vmem>>, %arg7: memref<1x8x1xf32, #tpu.memory_space<vmem>>) attributes {dimension_semantics = [#tpu.dimension_semantics<parallel>], iteration_bounds = array<i64: 2>, scalar_prefetch = 0 : i64, scratch_operands = 0 : i64, tpu.core_type = #tpu.core_type<tc>, window_params = [{transform_indices = @transform_0, window_bounds = array<i64: 1, 4, 256>}, {pipeline_mode = #tpu.pipeline_mode<synchronous>, transform_indices = @transform_1, window_bounds = array<i64: 8, 36>}, {pipeline_mode = #tpu.pipeline_mode<synchronous>, transform_indices = @transform_2, window_bounds = array<i64: 4, 1>}, {pipeline_mode = #tpu.pipeline_mode<synchronous>, transform_indices = @transform_3, window_bounds = array<i64: 4, 1>}, {transform_indices = @transform_4, window_bounds = array<i64: 1, 8, 256>}, {transform_indices = @transform_5, window_bounds = array<i64: 1, 8, 1>}, {transform_indices = @transform_6, window_bounds = array<i64: 1, 8, 1>}]} {
    %c0 = arith.constant 0 : index
    %c0_0 = arith.constant 0 : index
    %c0_1 = arith.constant 0 : index
    %0 = vector.load %arg1[%c0, %c0_0, %c0_1] : memref<1x4x256xf32, #tpu.memory_space<vmem>>, vector<1x4x256xf32>
    %1 = vector.shape_cast %0 : vector<1x4x256xf32> to vector<4x256xf32>
    %c0_2 = arith.constant 0 : index
    %c0_3 = arith.constant 0 : index
    %2 = vector.load %arg3[%c0_2, %c0_3] : memref<4x1xf32, #tpu.memory_space<vmem>>, vector<4x1xf32>
    %3 = vector.broadcast %2 : vector<4x1xf32> to vector<4x256xf32>
    %4 = arith.mulf %1, %3 : vector<4x256xf32>
    %c0_4 = arith.constant 0 : index
    %c0_5 = arith.constant 0 : index
    %5 = vector.load %arg4[%c0_4, %c0_5] : memref<4x1xf32, #tpu.memory_space<vmem>>, vector<4x1xf32>
    %6 = vector.broadcast %5 : vector<4x1xf32> to vector<4x256xf32>
    %7 = arith.addf %4, %6 : vector<4x256xf32>
    %cst = arith.constant 2.000000e+01 : f32
    %8 = vector.broadcast %cst : f32 to vector<4x256xf32>
    %9 = arith.minimumf %7, %8 : vector<4x256xf32>
    %10 = math.exp %9 : vector<4x256xf32>
    %cst_6 = arith.constant 2.000000e+00 : f32
    %11 = vector.broadcast %cst_6 : f32 to vector<4x256xf32>
    %12 = arith.addf %10, %11 : vector<4x256xf32>
    %13 = arith.mulf %10, %12 : vector<4x256xf32>
    %14 = arith.mulf %7, %13 : vector<4x256xf32>
    %cst_7 = arith.constant 2.000000e+00 : f32
    %15 = vector.broadcast %cst_7 : f32 to vector<4x256xf32>
    %16 = arith.addf %13, %15 : vector<4x256xf32>
    %17 = tpu.reciprocal %16 : vector<4x256xf32> -> vector<4x256xf32>
    %18 = arith.mulf %14, %17 : vector<4x256xf32>
    %cst_8 = arith.constant 0.000000e+00 : f32
    %19 = vector.broadcast %cst_8 : f32 to vector<4x17xf32>
    %20 = tpu.concatenate %19, %18, %19 in 1 : vector<4x17xf32>, vector<4x256xf32>, vector<4x17xf32> -> vector<4x290xf32>
    %21 = tpu.iota {dimensions = array<i32: 1>} : vector<4x256xi32>
    %c16_i32 = arith.constant 16 : i32
    %c0_i32 = arith.constant 0 : i32
    %22 = arith.cmpi eq, %c16_i32, %c0_i32 : i32
    %c1_i32 = arith.constant 1 : i32
    %23 = arith.select %22, %c1_i32, %c16_i32 : i32
    %24 = vector.broadcast %23 : i32 to vector<4x256xi32>
    %25 = arith.remsi %21, %24 : vector<4x256xi32>
    %c0_i32_9 = arith.constant 0 : i32
    %26 = vector.broadcast %c0_i32_9 : i32 to vector<4x256xi32>
    %27 = arith.cmpi ne, %25, %26 : vector<4x256xi32>
    %c0_i32_10 = arith.constant 0 : i32
    %28 = vector.broadcast %c0_i32_10 : i32 to vector<4x256xi32>
    %29 = arith.cmpi slt, %25, %28 : vector<4x256xi32>
    %c0_i32_11 = arith.constant 0 : i32
    %30 = arith.cmpi slt, %23, %c0_i32_11 : i32
    %31 = vector.broadcast %30 : i1 to vector<4x256xi1>
    %32 = vector.broadcast %31 : vector<4x256xi1> to vector<4x256xi1>
    %33 = arith.xori %29, %32 : vector<4x256xi1>
    %34 = arith.andi %33, %27 : vector<4x256xi1>
    %35 = vector.broadcast %23 : i32 to vector<4x256xi32>
    %36 = arith.addi %25, %35 : vector<4x256xi32>
    %37 = arith.select %34, %36, %25 : vector<4x256xi1>, vector<4x256xi32>
    %c0_i32_12 = arith.constant 0 : i32
    %38 = vector.broadcast %c0_i32_12 : i32 to vector<4x256xi32>
    %39 = arith.cmpi ne, %37, %38 : vector<4x256xi32>
    %c15_i32 = arith.constant 15 : i32
    %40 = vector.broadcast %c15_i32 : i32 to vector<4x256xi32>
    %41 = arith.cmpi ne, %37, %40 : vector<4x256xi32>
    %c16_i32_13 = arith.constant 16 : i32
    %42 = vector.broadcast %c16_i32_13 : i32 to vector<4x256xi32>
    %43 = arith.cmpi sge, %21, %42 : vector<4x256xi32>
    %c240_i32 = arith.constant 240 : i32
    %44 = vector.broadcast %c240_i32 : i32 to vector<4x256xi32>
    %45 = arith.cmpi slt, %21, %44 : vector<4x256xi32>
    %46 = vector.extract_strided_slice %20 {offsets = [0, 0], sizes = [4, 256], strides = [1, 1]} : vector<4x290xf32> to vector<4x256xf32>
    %cst_14 = arith.constant 0.000000e+00 : f32
    %47 = vector.broadcast %cst_14 : f32 to vector<4x256xf32>
    %48 = arith.select %43, %46, %47 : vector<4x256xi1>, vector<4x256xf32>
    %cst_15 = arith.constant 0.000000e+00 : f32
    %49 = vector.broadcast %cst_15 : f32 to vector<4x256xf32>
    %50 = arith.select %39, %48, %49 : vector<4x256xi1>, vector<4x256xf32>
    %51 = vector.extract_strided_slice %20 {offsets = [0, 1], sizes = [4, 256], strides = [1, 1]} : vector<4x290xf32> to vector<4x256xf32>
    %cst_16 = arith.constant 0.000000e+00 : f32
    %52 = vector.broadcast %cst_16 : f32 to vector<4x256xf32>
    %53 = arith.select %43, %51, %52 : vector<4x256xi1>, vector<4x256xf32>
    %54 = vector.extract_strided_slice %20 {offsets = [0, 2], sizes = [4, 256], strides = [1, 1]} : vector<4x290xf32> to vector<4x256xf32>
    %cst_17 = arith.constant 0.000000e+00 : f32
    %55 = vector.broadcast %cst_17 : f32 to vector<4x256xf32>
    %56 = arith.select %43, %54, %55 : vector<4x256xi1>, vector<4x256xf32>
    %cst_18 = arith.constant 0.000000e+00 : f32
    %57 = vector.broadcast %cst_18 : f32 to vector<4x256xf32>
    %58 = arith.select %41, %56, %57 : vector<4x256xi1>, vector<4x256xf32>
    %59 = vector.extract_strided_slice %20 {offsets = [0, 16], sizes = [4, 256], strides = [1, 1]} : vector<4x290xf32> to vector<4x256xf32>
    %cst_19 = arith.constant 0.000000e+00 : f32
    %60 = vector.broadcast %cst_19 : f32 to vector<4x256xf32>
    %61 = arith.select %39, %59, %60 : vector<4x256xi1>, vector<4x256xf32>
    %62 = vector.extract_strided_slice %20 {offsets = [0, 17], sizes = [4, 256], strides = [1, 1]} : vector<4x290xf32> to vector<4x256xf32>
    %63 = vector.extract_strided_slice %20 {offsets = [0, 18], sizes = [4, 256], strides = [1, 1]} : vector<4x290xf32> to vector<4x256xf32>
    %cst_20 = arith.constant 0.000000e+00 : f32
    %64 = vector.broadcast %cst_20 : f32 to vector<4x256xf32>
    %65 = arith.select %41, %63, %64 : vector<4x256xi1>, vector<4x256xf32>
    %66 = vector.extract_strided_slice %20 {offsets = [0, 32], sizes = [4, 256], strides = [1, 1]} : vector<4x290xf32> to vector<4x256xf32>
    %cst_21 = arith.constant 0.000000e+00 : f32
    %67 = vector.broadcast %cst_21 : f32 to vector<4x256xf32>
    %68 = arith.select %45, %66, %67 : vector<4x256xi1>, vector<4x256xf32>
    %cst_22 = arith.constant 0.000000e+00 : f32
    %69 = vector.broadcast %cst_22 : f32 to vector<4x256xf32>
    %70 = arith.select %39, %68, %69 : vector<4x256xi1>, vector<4x256xf32>
    %71 = vector.extract_strided_slice %20 {offsets = [0, 33], sizes = [4, 256], strides = [1, 1]} : vector<4x290xf32> to vector<4x256xf32>
    %cst_23 = arith.constant 0.000000e+00 : f32
    %72 = vector.broadcast %cst_23 : f32 to vector<4x256xf32>
    %73 = arith.select %45, %71, %72 : vector<4x256xi1>, vector<4x256xf32>
    %74 = vector.extract_strided_slice %20 {offsets = [0, 34], sizes = [4, 256], strides = [1, 1]} : vector<4x290xf32> to vector<4x256xf32>
    %cst_24 = arith.constant 0.000000e+00 : f32
    %75 = vector.broadcast %cst_24 : f32 to vector<4x256xf32>
    %76 = arith.select %45, %74, %75 : vector<4x256xi1>, vector<4x256xf32>
    %cst_25 = arith.constant 0.000000e+00 : f32
    %77 = vector.broadcast %cst_25 : f32 to vector<4x256xf32>
    %78 = arith.select %41, %76, %77 : vector<4x256xi1>, vector<4x256xf32>
    %79 = tpu.concatenate %50, %53, %58, %61, %62, %65, %70, %73, %78 in 0 : vector<4x256xf32>, vector<4x256xf32>, vector<4x256xf32>, vector<4x256xf32>, vector<4x256xf32>, vector<4x256xf32>, vector<4x256xf32>, vector<4x256xf32>, vector<4x256xf32> -> vector<36x256xf32>
    %c0_26 = arith.constant 0 : index
    %c0_27 = arith.constant 0 : index
    %80 = vector.load %arg2[%c0_26, %c0_27] : memref<8x36xf32, #tpu.memory_space<vmem>>, vector<8x36xf32>
    %cst_28 = arith.constant dense<0.000000e+00> : vector<8x256xf32>
    %81 = tpu.matmul %80, %79, %cst_28 {dimension_numbers = #tpu.dot_dimension_numbers<[1], [0], [0], [1], [0, 0, 1, 1], [], []>} : vector<8x36xf32>, vector<36x256xf32>, vector<8x256xf32> -> vector<8x256xf32>
    %c0_29 = arith.constant 0 : index
    %c0_30 = arith.constant 0 : index
    %c0_31 = arith.constant 0 : index
    %82 = vector.load %arg5[%c0_29, %c0_30, %c0_31] : memref<1x8x256xf32, #tpu.memory_space<vmem>>, vector<1x8x256xf32>
    %83 = vector.shape_cast %82 : vector<1x8x256xf32> to vector<8x256xf32>
    %84 = vector.shape_cast %81 : vector<8x256xf32> to vector<1x8x256xf32>
    tpu.vector_store %arg5[%c0_29, %c0_30, %c0_31], %84 {strides = array<i32>} : memref<1x8x256xf32, #tpu.memory_space<vmem>>, vector<1x8x256xf32>,
    %cst_32 = arith.constant dense<0.000000e+00> : vector<8xf32>
    %85 = vector.multi_reduction <add>, %81, %cst_32 [1] : vector<8x256xf32> to vector<8xf32>
    %86 = vector.shape_cast %85 : vector<8xf32> to vector<8x1xf32>
    %c0_33 = arith.constant 0 : index
    %c0_34 = arith.constant 0 : index
    %c0_35 = arith.constant 0 : index
    %87 = vector.load %arg6[%c0_33, %c0_34, %c0_35] : memref<1x8x1xf32, #tpu.memory_space<vmem>>, vector<1x8x1xf32>
    %88 = vector.shape_cast %87 : vector<1x8x1xf32> to vector<8x1xf32>
    %89 = vector.shape_cast %86 : vector<8x1xf32> to vector<1x8x1xf32>
    tpu.vector_store %arg6[%c0_33, %c0_34, %c0_35], %89 {strides = array<i32>} : memref<1x8x1xf32, #tpu.memory_space<vmem>>, vector<1x8x1xf32>,
    %90 = arith.mulf %81, %81 : vector<8x256xf32>
    %cst_36 = arith.constant dense<0.000000e+00> : vector<8xf32>
    %91 = vector.multi_reduction <add>, %90, %cst_36 [1] : vector<8x256xf32> to vector<8xf32>
    %92 = vector.shape_cast %91 : vector<8xf32> to vector<8x1xf32>
    %c0_37 = arith.constant 0 : index
    %c0_38 = arith.constant 0 : index
    %c0_39 = arith.constant 0 : index
    %93 = vector.load %arg7[%c0_37, %c0_38, %c0_39] : memref<1x8x1xf32, #tpu.memory_space<vmem>>, vector<1x8x1xf32>
    %94 = vector.shape_cast %93 : vector<1x8x1xf32> to vector<8x1xf32>
    %95 = vector.shape_cast %92 : vector<8x1xf32> to vector<1x8x1xf32>
    tpu.vector_store %arg7[%c0_37, %c0_38, %c0_39], %95 {strides = array<i32>} : memref<1x8x1xf32, #tpu.memory_space<vmem>>, vector<1x8x1xf32>,
    return
  }
  func.func @transform_0(%arg0: i32) -> (i32, i32, i32) {
    %c0_i32 = arith.constant 0 : i32
    %c0_i32_0 = arith.constant 0 : i32
    %c0_i32_1 = arith.constant 0 : i32
    return %arg0, %c0_i32, %c0_i32_0 : i32, i32, i32
  }
  func.func @transform_1(%arg0: i32) -> (i32, i32) {
    %c0_i32 = arith.constant 0 : i32
    %c0_i32_0 = arith.constant 0 : i32
    %c0_i32_1 = arith.constant 0 : i32
    return %c0_i32, %c0_i32_0 : i32, i32
  }
  func.func @transform_2(%arg0: i32) -> (i32, i32) {
    %c0_i32 = arith.constant 0 : i32
    %c0_i32_0 = arith.constant 0 : i32
    %c0_i32_1 = arith.constant 0 : i32
    return %c0_i32, %c0_i32_0 : i32, i32
  }
  func.func @transform_3(%arg0: i32) -> (i32, i32) {
    %c0_i32 = arith.constant 0 : i32
    %c0_i32_0 = arith.constant 0 : i32
    %c0_i32_1 = arith.constant 0 : i32
    return %c0_i32, %c0_i32_0 : i32, i32
  }
  func.func @transform_4(%arg0: i32) -> (i32, i32, i32) {
    %c0_i32 = arith.constant 0 : i32
    %c0_i32_0 = arith.constant 0 : i32
    %c0_i32_1 = arith.constant 0 : i32
    return %arg0, %c0_i32, %c0_i32_0 : i32, i32, i32
  }
  func.func @transform_5(%arg0: i32) -> (i32, i32, i32) {
    %c0_i32 = arith.constant 0 : i32
    %c0_i32_0 = arith.constant 0 : i32
    %c0_i32_1 = arith.constant 0 : i32
    return %arg0, %c0_i32, %c0_i32_0 : i32, i32, i32
  }
  func.func @transform_6(%arg0: i32) -> (i32, i32, i32) {
    %c0_i32 = arith.constant 0 : i32
    %c0_i32_0 = arith.constant 0 : i32
    %c0_i32_1 = arith.constant 0 : i32
    return %arg0, %c0_i32, %c0_i32_0 : i32, i32, i32
  }
}

module attributes {stable_mosaic.version = 11 : i64} {
  func.func @_bn2_mish_res_kernel(%arg0: i32, %arg1: memref<1x8x256xf32, #tpu.memory_space<vmem>>, %arg2: memref<1x8x256xf32, #tpu.memory_space<vmem>>, %arg3: memref<8x1xf32, #tpu.memory_space<vmem>>, %arg4: memref<8x1xf32, #tpu.memory_space<vmem>>, %arg5: memref<1x8x256xf32, #tpu.memory_space<vmem>>) attributes {dimension_semantics = [#tpu.dimension_semantics<parallel>], iteration_bounds = array<i64: 2>, scalar_prefetch = 0 : i64, scratch_operands = 0 : i64, tpu.core_type = #tpu.core_type<tc>, window_params = [{transform_indices = @transform_0, window_bounds = array<i64: 1, 8, 256>}, {transform_indices = @transform_1, window_bounds = array<i64: 1, 8, 256>}, {pipeline_mode = #tpu.pipeline_mode<synchronous>, transform_indices = @transform_2, window_bounds = array<i64: 8, 1>}, {pipeline_mode = #tpu.pipeline_mode<synchronous>, transform_indices = @transform_3, window_bounds = array<i64: 8, 1>}, {transform_indices = @transform_4, window_bounds = array<i64: 1, 8, 256>}]} {
    %c0 = arith.constant 0 : index
    %c0_0 = arith.constant 0 : index
    %c0_1 = arith.constant 0 : index
    %0 = vector.load %arg1[%c0, %c0_0, %c0_1] : memref<1x8x256xf32, #tpu.memory_space<vmem>>, vector<1x8x256xf32>
    %1 = vector.shape_cast %0 : vector<1x8x256xf32> to vector<8x256xf32>
    %c0_2 = arith.constant 0 : index
    %c0_3 = arith.constant 0 : index
    %2 = vector.load %arg3[%c0_2, %c0_3] : memref<8x1xf32, #tpu.memory_space<vmem>>, vector<8x1xf32>
    %3 = vector.broadcast %2 : vector<8x1xf32> to vector<8x256xf32>
    %4 = arith.mulf %1, %3 : vector<8x256xf32>
    %c0_4 = arith.constant 0 : index
    %c0_5 = arith.constant 0 : index
    %5 = vector.load %arg4[%c0_4, %c0_5] : memref<8x1xf32, #tpu.memory_space<vmem>>, vector<8x1xf32>
    %6 = vector.broadcast %5 : vector<8x1xf32> to vector<8x256xf32>
    %7 = arith.addf %4, %6 : vector<8x256xf32>
    %c0_6 = arith.constant 0 : index
    %c0_7 = arith.constant 0 : index
    %c0_8 = arith.constant 0 : index
    %8 = vector.load %arg2[%c0_6, %c0_7, %c0_8] : memref<1x8x256xf32, #tpu.memory_space<vmem>>, vector<1x8x256xf32>
    %9 = vector.shape_cast %8 : vector<1x8x256xf32> to vector<8x256xf32>
    %cst = arith.constant 2.000000e+01 : f32
    %10 = vector.broadcast %cst : f32 to vector<8x256xf32>
    %11 = arith.minimumf %7, %10 : vector<8x256xf32>
    %12 = math.exp %11 : vector<8x256xf32>
    %cst_9 = arith.constant 2.000000e+00 : f32
    %13 = vector.broadcast %cst_9 : f32 to vector<8x256xf32>
    %14 = arith.addf %12, %13 : vector<8x256xf32>
    %15 = arith.mulf %12, %14 : vector<8x256xf32>
    %16 = arith.mulf %7, %15 : vector<8x256xf32>
    %cst_10 = arith.constant 2.000000e+00 : f32
    %17 = vector.broadcast %cst_10 : f32 to vector<8x256xf32>
    %18 = arith.addf %15, %17 : vector<8x256xf32>
    %19 = tpu.reciprocal %18 : vector<8x256xf32> -> vector<8x256xf32>
    %20 = arith.mulf %16, %19 : vector<8x256xf32>
    %21 = arith.addf %9, %20 : vector<8x256xf32>
    %c0_11 = arith.constant 0 : index
    %c0_12 = arith.constant 0 : index
    %c0_13 = arith.constant 0 : index
    %22 = vector.load %arg5[%c0_11, %c0_12, %c0_13] : memref<1x8x256xf32, #tpu.memory_space<vmem>>, vector<1x8x256xf32>
    %23 = vector.shape_cast %22 : vector<1x8x256xf32> to vector<8x256xf32>
    %24 = vector.shape_cast %21 : vector<8x256xf32> to vector<1x8x256xf32>
    tpu.vector_store %arg5[%c0_11, %c0_12, %c0_13], %24 {strides = array<i32>} : memref<1x8x256xf32, #tpu.memory_space<vmem>>, vector<1x8x256xf32>,
    return
  }
  func.func @transform_0(%arg0: i32) -> (i32, i32, i32) {
    %c0_i32 = arith.constant 0 : i32
    %c0_i32_0 = arith.constant 0 : i32
    %c0_i32_1 = arith.constant 0 : i32
    return %arg0, %c0_i32, %c0_i32_0 : i32, i32, i32
  }
  func.func @transform_1(%arg0: i32) -> (i32, i32, i32) {
    %c0_i32 = arith.constant 0 : i32
    %c0_i32_0 = arith.constant 0 : i32
    %c0_i32_1 = arith.constant 0 : i32
    return %arg0, %c0_i32, %c0_i32_0 : i32, i32, i32
  }
  func.func @transform_2(%arg0: i32) -> (i32, i32) {
    %c0_i32 = arith.constant 0 : i32
    %c0_i32_0 = arith.constant 0 : i32
    %c0_i32_1 = arith.constant 0 : i32
    return %c0_i32, %c0_i32_0 : i32, i32
  }
  func.func @transform_3(%arg0: i32) -> (i32, i32) {
    %c0_i32 = arith.constant 0 : i32
    %c0_i32_0 = arith.constant 0 : i32
    %c0_i32_1 = arith.constant 0 : i32
    return %c0_i32, %c0_i32_0 : i32, i32
  }
  func.func @transform_4(%arg0: i32) -> (i32, i32, i32) {
    %c0_i32 = arith.constant 0 : i32
    %c0_i32_0 = arith.constant 0 : i32
    %c0_i32_1 = arith.constant 0 : i32
    return %arg0, %c0_i32, %c0_i32_0 : i32, i32, i32
  }
}

</mosaic_0001>

<llo_original>
// kernel: res_residual_block.3
$region0: #{res_residual_block.3}
  #allocation0 [shape = 'u32[]', space=smem, size = 0x4, offset = 0x4, fixed_abs, tag = 'smem constant byte address 0x4 - core index']
  #allocation1 [shape = 'u32[144,128]{1,0:T(1,128)}', space=vmem, size = 0x12000, scoped, tag = 'internal scratch']
  %s0 = inlined_call_operand.vmem [shape: f32[2,8,256], index: 0, kind: input, shape index: {}]
  %s1 = inlined_call_operand.vmem [shape: f32[4,8], index: 1, kind: input, shape index: {}]
  %s2 = inlined_call_operand.vmem [shape: f32[2,4,256], index: 2, kind: output, shape index: {0}]
  %s3 = inlined_call_operand.vmem [shape: f32[2,4,1], index: 3, kind: output, shape index: {1}]
  %s4 = inlined_call_operand.vmem [shape: f32[2,4,1], index: 4, kind: output, shape index: {2}]
  %5 = xla_tuple %s2, %s3, %s4
  %s6 = sld [smem:[#allocation0]]
  $region57: #{res_residual_block.3} parent=0
    _
  %s8 = ssub.s32 1, %s6
  %s9 = scalar_select 0, %s8, %s6
  loop: start=0, step=1, limit=4
  $region2: #{res_residual_block.3} parent=0 // loop_pre_header
    _
  $region3: #{res_residual_block.3} parent=0 // loop_header
    %s11 = sphi 0, %s15
    %p12 = scmp.ge.s32.totalorder %s11, 4
    %s21 = sphi 0, %s23
    %s24 = sphi 0, %s21
    %s25 = sphi 0, %s24
    %s41 = sphi 0, %s25
    %s45 = sphi 0, %s45
    %s47 = sphi 0, %s45
    %s48 = sphi 0, %s47
    %s62 = sphi 0, %s48
    %s68 = sphi 0, %s70
    %s71 = sphi 0, %s68
    %s72 = sphi 0, %s71
    %s88 = sphi 0, %s72
    %s94 = sphi 0, %s96
    %s97 = sphi 0, %s94
    %s98 = sphi 0, %s97
    %s114 = sphi 0, %s98
    %s120 = sphi 0, %s122
    %s123 = sphi 0, %s120
    %s124 = sphi 0, %s123
    %s140 = sphi 0, %s124
  $region4: #{res_residual_block.3} parent=0 // loop_header_branch
    %14 = sbr.rel (%p12) target = $region8
  $region5: #{res_residual_block.3} parent=0 // loop_body
    %s16 = ssub.s32 %s11, 1
    %s17 = ssub.s32 %s11, 2
    %s18 = sadd.s32 %s11, 1
    %s19 = ssub.s32 %s11, %s18
    %p20 = scmp.eq.s32.totalorder %s19, 0
    %s22 = sadd.s32 %s21, 1
    %s23 = scalar_select %p20, %s21, %s22
    %p26 = pneg %p20
    %p27 = scmp.eq.s32.totalorder %s11, 1
    %p28 = por %p26, %p27
    %p29 = scmp.ne.s32.totalorder %s21, %s24
    %p30 = scmp.eq.s32.totalorder %s11, 0
    %p31 = por %p29, %p30
    %p32 = scmp.ne.s32.totalorder %s21, %s24
    %p33 = scmp.eq.s32.totalorder %s16, 1
    %p34 = por %p32, %p33
    %p35 = scmp.ne.s32.totalorder %s24, %s25
    %p36 = scmp.eq.s32.totalorder %s16, 0
    %p37 = por %p35, %p36
    %p38 = scmp.ne.s32.totalorder %s24, %s25
    %p39 = scmp.eq.s32.totalorder %s17, 1
    %p40 = por %p38, %p39
    %p42 = scmp.ne.s32.totalorder %s25, %s41
    %p43 = scmp.eq.s32.totalorder %s17, 0
    %p44 = por %p42, %p43
    %s46 = sadd.s32 %s45, 1
    %p49 = scmp.eq.s32.totalorder %s11, 1
    %p50 = scmp.ne.s32.totalorder %s45, %s47
    %p51 = scmp.eq.s32.totalorder %s11, 0
    %p52 = por %p50, %p51
    %p53 = scmp.ne.s32.totalorder %s45, %s47
    %p54 = scmp.eq.s32.totalorder %s16, 1
    %p55 = por %p53, %p54
    %p56 = scmp.ne.s32.totalorder %s47, %s48
    %p57 = scmp.eq.s32.totalorder %s16, 0
    %p58 = por %p56, %p57
    %p59 = scmp.ne.s32.totalorder %s47, %s48
    %p60 = scmp.eq.s32.totalorder %s17, 1
    %p61 = por %p59, %p60
    %p63 = scmp.ne.s32.totalorder %s48, %s62
    %p64 = scmp.eq.s32.totalorder %s17, 0
    %p65 = por %p63, %p64
    %s66 = ssub.s32 %s11, %s18
    %p67 = scmp.eq.s32.totalorder %s66, 0
    %s69 = sadd.s32 %s68, 1
    %s70 = scalar_select %p67, %s68, %s69
    %p73 = pneg %p67
    %p74 = scmp.eq.s32.totalorder %s11, 1
    %p75 = por %p73, %p74
    %p76 = scmp.ne.s32.totalorder %s68, %s71
    %p77 = scmp.eq.s32.totalorder %s11, 0
    %p78 = por %p76, %p77
    %p79 = scmp.ne.s32.totalorder %s68, %s71
    %p80 = scmp.eq.s32.totalorder %s16, 1
    %p81 = por %p79, %p80
    %p82 = scmp.ne.s32.totalorder %s71, %s72
    %p83 = scmp.eq.s32.totalorder %s16, 0
    %p84 = por %p82, %p83
    %p85 = scmp.ne.s32.totalorder %s71, %s72
    %p86 = scmp.eq.s32.totalorder %s17, 1
    %p87 = por %p85, %p86
    %p89 = scmp.ne.s32.totalorder %s72, %s88
    %p90 = scmp.eq.s32.totalorder %s17, 0
    %p91 = por %p89, %p90
    %s92 = ssub.s32 %s11, %s18
    %p93 = scmp.eq.s32.totalorder %s92, 0
    %s95 = sadd.s32 %s94, 1
    %s96 = scalar_select %p93, %s94, %s95
    %p99 = pneg %p93
    %p100 = scmp.eq.s32.totalorder %s11, 1
    %p101 = por %p99, %p100
    %p102 = scmp.ne.s32.totalorder %s94, %s97
    %p103 = scmp.eq.s32.totalorder %s11, 0
    %p104 = por %p102, %p103
    %p105 = scmp.ne.s32.totalorder %s94, %s97
    %p106 = scmp.eq.s32.totalorder %s16, 1
    %p107 = por %p105, %p106
    %p108 = scmp.ne.s32.totalorder %s97, %s98
    %p109 = scmp.eq.s32.totalorder %s16, 0
    %p110 = por %p108, %p109
    %p111 = scmp.ne.s32.totalorder %s97, %s98
    %p112 = scmp.eq.s32.totalorder %s17, 1
    %p113 = por %p111, %p112
    %p115 = scmp.ne.s32.totalorder %s98, %s114
    %p116 = scmp.eq.s32.totalorder %s17, 0
    %p117 = por %p115, %p116
    %s118 = ssub.s32 %s11, %s18
    %p119 = scmp.eq.s32.totalorder %s118, 0
    %s121 = sadd.s32 %s120, 1
    %s122 = scalar_select %p119, %s120, %s121
    %p125 = pneg %p119
    %p126 = scmp.eq.s32.totalorder %s11, 1
    %p127 = por %p125, %p126
    %p128 = scmp.ne.s32.totalorder %s120, %s123
    %p129 = scmp.eq.s32.totalorder %s11, 0
    %p130 = por %p128, %p129
    %p131 = scmp.ne.s32.totalorder %s120, %s123
    %p132 = scmp.eq.s32.totalorder %s16, 1
    %p133 = por %p131, %p132
    %p134 = scmp.ne.s32.totalorder %s123, %s124
    %p135 = scmp.eq.s32.totalorder %s16, 0
    %p136 = por %p134, %p135
    %p137 = scmp.ne.s32.totalorder %s123, %s124
    %p138 = scmp.eq.s32.totalorder %s17, 1
    %p139 = por %p137, %p138
    %p141 = scmp.ne.s32.totalorder %s124, %s140
    %p142 = scmp.eq.s32.totalorder %s17, 0
    %p143 = por %p141, %p142
    %p144 = scmp.le.s32.totalorder 1, %s11
    %p145 = scmp.lt.s32.totalorder %s11, 3
    %p146 = pnand %p144, %p145
    %p147 = pneg %p146
    // Predicated region
    $region9: #{res_residual_block.3} parent=5 // pred_check
      _
    $region10: #{res_residual_block.3} parent=5 // pred_check_branch
      %149 = sbr.rel (%p146) target = $region12
    $region11: #{res_residual_block.3} parent=5 // pred_region
      %s150 = ssub.s32 %s11, 1
      // Predicated region
      $region13: #{res_residual_block.3} parent=11 // pred_check
        %p151 = pneg %p58
      $region14: #{res_residual_block.3} parent=11 // pred_check_branch
        %153 = sbr.rel (%p151) target = $region16
      $region15: #{res_residual_block.3} parent=11 // pred_region
        _
      $region16: #{res_residual_block.3} parent=11 // pred_fallthru
        _
    $region12: #{res_residual_block.3} parent=5 // pred_fallthru
      _
    %p154 = scmp.lt.s32.totalorder %s11, 2
    // Predicated region
    $region17: #{res_residual_block.3} parent=5 // pred_check
      %p155 = pneg %p154
    $region18: #{res_residual_block.3} parent=5 // pred_check_branch
      %157 = sbr.rel (%p155) target = $region20
    $region19: #{res_residual_block.3} parent=5 // pred_region
      // Predicated region
      $region21: #{res_residual_block.3} parent=19 // pred_check
        %p158 = pneg %p31
      $region22: #{res_residual_block.3} parent=19 // pred_check_branch
        %160 = sbr.rel (%p158) target = $region24
      $region23: #{res_residual_block.3} parent=19 // pred_region
        %p161 = scmp.lt.s32.totalorder %s11, 1
        %s162 = scalar_select %p161, %s11, 1
        %s163 = smul.addr %s162, 2
        %s164 = smul.addr %s163, 8
        %s165 = scalar_lea.vmem %s0, %s164
      $region24: #{res_residual_block.3} parent=19 // pred_fallthru
        _
    $region20: #{res_residual_block.3} parent=5 // pred_fallthru
      _
    %p166 = scmp.le.s32.totalorder 1, %s11
    %p167 = scmp.lt.s32.totalorder %s11, 3
    %p168 = pnand %p166, %p167
    %p169 = pneg %p168
    // Predicated region
    $region25: #{res_residual_block.3} parent=5 // pred_check
      _
    $region26: #{res_residual_block.3} parent=5 // pred_check_branch
      %171 = sbr.rel (%p168) target = $region28
    $region27: #{res_residual_block.3} parent=5 // pred_region
      %s172 = ssub.s32 %s11, 1
      %p173 = scmp.lt.s32.totalorder %s16, 1
      %s174 = scalar_select %p173, %s16, 1
      %s175 = smul.addr %s174, 2
      %s176 = smul.addr %s175, 8
      %s177 = scalar_lea.vmem %s0, %s176
      %p178 = pneg %p37
      %p179 = pneg %p34
      %p180 = pneg %p58
      %p181 = pneg %p55
      %p182 = pneg %p84
      %p183 = pneg %p81
      %p184 = scmp.lt.s32.totalorder %s16, 1
      %s185 = scalar_select %p184, %s16, 1
      %s186 = smul.addr %s185, 2
      %s187 = smul.addr %s186, 4
      %s188 = scalar_lea.vmem %s2, %s187
      %p189 = pneg %p110
      %p190 = pneg %p107
      %p191 = scmp.lt.s32.totalorder %s16, 1
      %s192 = scalar_select %p191, %s16, 1
      %s193 = smul.addr %s192, 4
      %s194 = scalar_lea.vmem %s3, %s193
      %p195 = pneg %p136
      %p196 = pneg %p133
      %p197 = scmp.lt.s32.totalorder %s16, 1
      %s198 = scalar_select %p197, %s16, 1
      %s199 = smul.addr %s198, 4
      %s200 = scalar_lea.vmem %s4, %s199
      %p201 = scmp.lt.s32.totalorder %s16, 1
      %s202 = scalar_select %p201, %s16, 1
      %s203 = smul.addr %s202, 2
      %s204 = smul.addr %s203, 8
      %s205 = scalar_lea.vmem %s0, %s204
      %p206 = scmp.lt.s32.totalorder %s16, 1
      %s207 = scalar_select %p206, %s16, 1
      %s208 = smul.addr %s207, 2
      %s209 = smul.addr %s208, 4
      %s210 = scalar_lea.vmem %s2, %s209
      %p211 = scmp.lt.s32.totalorder %s16, 1
      %s212 = scalar_select %p211, %s16, 1
      %s213 = smul.addr %s212, 4
      %s214 = scalar_lea.vmem %s3, %s213
      %p215 = scmp.lt.s32.totalorder %s16, 1
      %s216 = scalar_select %p215, %s16, 1
      %s217 = smul.addr %s216, 4
      %s218 = scalar_lea.vmem %s4, %s217
      %v219 = vld [vmem:[%s1] sm:$0xf]
      %v220 = vld [vmem:[%s205] sm:$0xff]
      %v221 = vld [vmem:[%s205 + $0x8] sm:$0xff]
      %vm222 = vcmask 64512
      %v224 = vsel %vm222, %v219, 0
      %226 = vmatprep.subr.mxu0 0.0
      %227 = vmatpush1.msra.mxu0 0.0
      %228 = vmatprep.subr.mxu0 0.0
      %229 = vmatpush1.msra.mxu0 0.0
      %230 = vmatprep.subr.mxu0 0.0
      %231 = vmatpush1.msra.mxu0 0.0
      %232 = vmatprep.subr.mxu0 0.0
      %233 = vmatpush1.msra.mxu0 0.0
      %234 = vmatprep.subr.mxu0 0.0
      %235 = vmatpush1.msra.mxu0 0.0
      %236 = vmatprep.subr.mxu0 0.0
      %237 = vmatpush1.msra.mxu0 0.0
      %238 = vmatprep.subr.mxu0 0.0
      %239 = vmatpush1.msra.mxu0 0.0
      %240 = vmatprep.subr.mxu0 0.0
      %241 = vmatpush1.msra.mxu0 0.0
      %242 = vmatprep.subr.mxu0 0.0
      %243 = vmatpush1.msra.mxu0 0.0
      %244 = vmatprep.subr.mxu0 0.0
      %245 = vmatpush1.msra.mxu0 0.0
      %246 = vmatprep.subr.mxu0 0.0
      %247 = vmatpush1.msra.mxu0 0.0
      %248 = vmatprep.subr.mxu0 0.0
      %249 = vmatpush1.msra.mxu0 0.0
      %250 = vmatprep.subr.mxu0 0.0
      %251 = vmatpush1.msra.mxu0 0.0
      %252 = vmatprep.subr.mxu0 0.0
      %253 = vmatpush1.msra.mxu0 0.0
      %254 = vmatprep.subr.mxu0 0.0
      %255 = vmatpush1.msra.mxu0 0.0
      %256 = vmatprep.subr.mxu0 %v221
      %257 = vmatpush1.msra.mxu0 %v220
      %258 = vmatprep.subr.mxu0 0.0
      %259 = vmatpush2.msra.mxu0 0.0
      %260 = vmatprep.subr.mxu0 0.0
      %261 = vmatpush2.msra.mxu0 0.0
      %262 = vmatprep.subr.mxu0 0.0
      %263 = vmatpush2.msra.mxu0 0.0
      %264 = vmatprep.subr.mxu0 0.0
      %265 = vmatpush2.msra.mxu0 0.0
      %266 = vmatprep.subr.mxu0 0.0
      %267 = vmatpush2.msra.mxu0 0.0
      %268 = vmatprep.subr.mxu0 0.0
      %269 = vmatpush2.msra.mxu0 0.0
      %270 = vmatprep.subr.mxu0 0.0
      %271 = vmatpush2.msra.mxu0 0.0
      %272 = vmatprep.subr.mxu0 0.0
      %273 = vmatpush2.msra.mxu0 0.0
      %274 = vmatprep.subr.mxu0 0.0
      %275 = vmatpush2.msra.mxu0 0.0
      %276 = vmatprep.subr.mxu0 0.0
      %277 = vmatpush2.msra.mxu0 0.0
      %278 = vmatprep.subr.mxu0 0.0
      %279 = vmatpush2.msra.mxu0 0.0
      %280 = vmatprep.subr.mxu0 0.0
      %281 = vmatpush2.msra.mxu0 0.0
      %282 = vmatprep.subr.mxu0 0.0
      %283 = vmatpush2.msra.mxu0 0.0
      %284 = vmatprep.subr.mxu0 0.0
      %285 = vmatpush2.msra.mxu0 0.0
      %286 = vmatprep.subr.mxu0 0.0
      %287 = vmatpush2.msra.mxu0 0.0
      %288 = vmatprep.subr.mxu0 0.0
      %289 = vmatpush2.msra.mxu0 0.0
      %290 = vmatprep.mubr.f32.mxu0 0.0
      %291 = vmatmul.mubr.f32.gmra.mxu0 %v224
      %v292 = vpop.f32.mrf.mxu0
      %v293 = vadd.f32 0.0, %v292
      %v294 = vpop.f32.mrf.mxu0
      %v295 = vadd.f32 0.0, %v294
      %296 = vdwg.mxu0
      %v299 = vcombine.low %v293, %v295
      %301 = vst [vmem:[%s210] sm:$0xff] %v299
      %vm302 = vcmask 1043456
      %v303 = vsel %vm302, %v293, 0.0
      %v304 = vsel %vm302, %v295, 0.0
      %v305 = vadd.f32 %v303, %v304
      %306 = vadd.xlane.f32.xlu0 %v305
      %v307 = vpop.xlane.xlu0 %306
      %vm308 = vcmask 3072
      %309 = vst.msk [vmem:[%s214] sm:$0xf] %vm308, %v307
      %v310 = vmul.f32 %v293, %v293
      %v311 = vmul.f32 %v295, %v295
      %v312 = vsel %vm302, %v310, 0.0
      %v313 = vsel %vm302, %v311, 0.0
      %v314 = vadd.f32 %v312, %v313
      %315 = vadd.xlane.f32.xlu0 %v314
      %v316 = vpop.xlane.xlu0 %315
      %317 = vst.msk [vmem:[%s218] sm:$0xf] %vm308, %v316
      %p318 = scmp.lt.s32.totalorder %s16, 1
      %s319 = scalar_select %p318, %s16, 1
      %s320 = smul.addr %s319, 2
      %s321 = smul.addr %s320, 4
      %s322 = scalar_lea.vmem %s2, %s321
      %p323 = scmp.lt.s32.totalorder %s16, 1
      %s324 = scalar_select %p323, %s16, 1
      %s325 = smul.addr %s324, 4
      %s326 = scalar_lea.vmem %s3, %s325
      %p327 = scmp.lt.s32.totalorder %s16, 1
      %s328 = scalar_select %p327, %s16, 1
      %s329 = smul.addr %s328, 4
      %s330 = scalar_lea.vmem %s4, %s329
      // Predicated region
      $region29: #{res_residual_block.3} parent=27 // pred_check
        %p331 = pneg %p81
      $region30: #{res_residual_block.3} parent=27 // pred_check_branch
        %333 = sbr.rel (%p331) target = $region32
      $region31: #{res_residual_block.3} parent=27 // pred_region
        _
      $region32: #{res_residual_block.3} parent=27 // pred_fallthru
        _
      // Predicated region
      $region33: #{res_residual_block.3} parent=27 // pred_check
        %p334 = pneg %p107
      $region34: #{res_residual_block.3} parent=27 // pred_check_branch
        %336 = sbr.rel (%p334) target = $region36
      $region35: #{res_residual_block.3} parent=27 // pred_region
        _
      $region36: #{res_residual_block.3} parent=27 // pred_fallthru
        _
      // Predicated region
      $region37: #{res_residual_block.3} parent=27 // pred_check
        %p337 = pneg %p133
      $region38: #{res_residual_block.3} parent=27 // pred_check_branch
        %339 = sbr.rel (%p337) target = $region40
      $region39: #{res_residual_block.3} parent=27 // pred_region
        _
      $region40: #{res_residual_block.3} parent=27 // pred_fallthru
        _
    $region28: #{res_residual_block.3} parent=5 // pred_fallthru
      _
    %p340 = scmp.le.s32.totalorder 2, %s11
    // Predicated region
    $region41: #{res_residual_block.3} parent=5 // pred_check
      %p341 = pneg %p340
    $region42: #{res_residual_block.3} parent=5 // pred_check_branch
      %343 = sbr.rel (%p341) target = $region44
    $region43: #{res_residual_block.3} parent=5 // pred_region
      %s344 = ssub.s32 %s11, 2
      // Predicated region
      $region45: #{res_residual_block.3} parent=43 // pred_check
        %p345 = pneg %p87
      $region46: #{res_residual_block.3} parent=43 // pred_check_branch
        %347 = sbr.rel (%p345) target = $region48
      $region47: #{res_residual_block.3} parent=43 // pred_region
        %p348 = scmp.lt.s32.totalorder %s17, 1
        %s349 = scalar_select %p348, %s17, 1
        %s350 = smul.addr %s349, 2
        %s351 = smul.addr %s350, 4
        %s352 = scalar_lea.vmem %s2, %s351
      $region48: #{res_residual_block.3} parent=43 // pred_fallthru
        _
      // Predicated region
      $region49: #{res_residual_block.3} parent=43 // pred_check
        %p353 = pneg %p113
      $region50: #{res_residual_block.3} parent=43 // pred_check_branch
        %355 = sbr.rel (%p353) target = $region52
      $region51: #{res_residual_block.3} parent=43 // pred_region
        %p356 = scmp.lt.s32.totalorder %s17, 1
        %s357 = scalar_select %p356, %s17, 1
        %s358 = smul.addr %s357, 4
        %s359 = scalar_lea.vmem %s3, %s358
      $region52: #{res_residual_block.3} parent=43 // pred_fallthru
        _
      // Predicated region
      $region53: #{res_residual_block.3} parent=43 // pred_check
        %p360 = pneg %p139
      $region54: #{res_residual_block.3} parent=43 // pred_check_branch
        %362 = sbr.rel (%p360) target = $region56
      $region55: #{res_residual_block.3} parent=43 // pred_region
        %p363 = scmp.lt.s32.totalorder %s17, 1
        %s364 = scalar_select %p363, %s17, 1
        %s365 = smul.addr %s364, 4
        %s366 = scalar_lea.vmem %s4, %s365
      $region56: #{res_residual_block.3} parent=43 // pred_fallthru
        _
    $region44: #{res_residual_block.3} parent=5 // pred_fallthru
      _
  $region6: #{res_residual_block.3} parent=0 // loop_footer
    %s15 = sadd.s32 1, %s11
  $region7: #{res_residual_block.3} parent=0 // loop_footer_branch
    %10 = sbr.rel target = $region3
  $region8: #{res_residual_block.3} parent=0 // loop_exit
    _

// kernel: res_residual_block.5
$region0: #{res_residual_block.5}
  #allocation0 [shape = 'u32[]', space=smem, size = 0x4, offset = 0x4, fixed_abs, tag = 'smem constant byte address 0x4 - core index']
  #allocation1 [shape = 'u32[144,128]{1,0:T(1,128)}', space=vmem, size = 0x12000, scoped, tag = 'internal scratch']
  %s0 = inlined_call_operand.vmem [shape: f32[2,8,256], index: 0, kind: input, shape index: {}, may-alias: {0,4}]
  %s1 = inlined_call_operand.vmem [shape: f32[2,8,256], index: 1, kind: input, shape index: {}]
  %s2 = inlined_call_operand.vmem [shape: f32[8,1], index: 2, kind: input, shape index: {}]
  %s3 = inlined_call_operand.vmem [shape: f32[8,1], index: 3, kind: input, shape index: {}]
  %s4 = inlined_call_operand.vmem [shape: f32[2,8,256], index: 4, kind: output, shape index: {}, may-alias: {0,4}]
  %s5 = sld [smem:[#allocation0]]
  $region49: #{res_residual_block.5} parent=0
    _
  %s7 = ssub.s32 1, %s5
  %s8 = scalar_select 0, %s7, %s5
  loop: start=0, step=1, limit=4
  $region2: #{res_residual_block.5} parent=0 // loop_pre_header
    _
  $region3: #{res_residual_block.5} parent=0 // loop_header
    %s10 = sphi 0, %s14
    %p11 = scmp.ge.s32.totalorder %s10, 4
    %s20 = sphi 0, %s22
    %s23 = sphi 0, %s20
    %s24 = sphi 0, %s23
    %s40 = sphi 0, %s24
    %s46 = sphi 0, %s48
    %s49 = sphi 0, %s46
    %s50 = sphi 0, %s49
    %s66 = sphi 0, %s50
    %s70 = sphi 0, %s70
    %s72 = sphi 0, %s70
    %s73 = sphi 0, %s72
    %s87 = sphi 0, %s73
    %s91 = sphi 0, %s91
    %s93 = sphi 0, %s91
    %s94 = sphi 0, %s93
    %s108 = sphi 0, %s94
    %s114 = sphi 0, %s116
    %s117 = sphi 0, %s114
    %s118 = sphi 0, %s117
    %s134 = sphi 0, %s118
  $region4: #{res_residual_block.5} parent=0 // loop_header_branch
    %13 = sbr.rel (%p11) target = $region8
  $region5: #{res_residual_block.5} parent=0 // loop_body
    %s15 = ssub.s32 %s10, 1
    %s16 = ssub.s32 %s10, 2
    %s17 = sadd.s32 %s10, 1
    %s18 = ssub.s32 %s10, %s17
    %p19 = scmp.eq.s32.totalorder %s18, 0
    %s21 = sadd.s32 %s20, 1
    %s22 = scalar_select %p19, %s20, %s21
    %p25 = pneg %p19
    %p26 = scmp.eq.s32.totalorder %s10, 1
    %p27 = por %p25, %p26
    %p28 = scmp.ne.s32.totalorder %s20, %s23
    %p29 = scmp.eq.s32.totalorder %s10, 0
    %p30 = por %p28, %p29
    %p31 = scmp.ne.s32.totalorder %s20, %s23
    %p32 = scmp.eq.s32.totalorder %s15, 1
    %p33 = por %p31, %p32
    %p34 = scmp.ne.s32.totalorder %s23, %s24
    %p35 = scmp.eq.s32.totalorder %s15, 0
    %p36 = por %p34, %p35
    %p37 = scmp.ne.s32.totalorder %s23, %s24
    %p38 = scmp.eq.s32.totalorder %s16, 1
    %p39 = por %p37, %p38
    %p41 = scmp.ne.s32.totalorder %s24, %s40
    %p42 = scmp.eq.s32.totalorder %s16, 0
    %p43 = por %p41, %p42
    %s44 = ssub.s32 %s10, %s17
    %p45 = scmp.eq.s32.totalorder %s44, 0
    %s47 = sadd.s32 %s46, 1
    %s48 = scalar_select %p45, %s46, %s47
    %p51 = pneg %p45
    %p52 = scmp.eq.s32.totalorder %s10, 1
    %p53 = por %p51, %p52
    %p54 = scmp.ne.s32.totalorder %s46, %s49
    %p55 = scmp.eq.s32.totalorder %s10, 0
    %p56 = por %p54, %p55
    %p57 = scmp.ne.s32.totalorder %s46, %s49
    %p58 = scmp.eq.s32.totalorder %s15, 1
    %p59 = por %p57, %p58
    %p60 = scmp.ne.s32.totalorder %s49, %s50
    %p61 = scmp.eq.s32.totalorder %s15, 0
    %p62 = por %p60, %p61
    %p63 = scmp.ne.s32.totalorder %s49, %s50
    %p64 = scmp.eq.s32.totalorder %s16, 1
    %p65 = por %p63, %p64
    %p67 = scmp.ne.s32.totalorder %s50, %s66
    %p68 = scmp.eq.s32.totalorder %s16, 0
    %p69 = por %p67, %p68
    %s71 = sadd.s32 %s70, 1
    %p74 = scmp.eq.s32.totalorder %s10, 1
    %p75 = scmp.ne.s32.totalorder %s70, %s72
    %p76 = scmp.eq.s32.totalorder %s10, 0
    %p77 = por %p75, %p76
    %p78 = scmp.ne.s32.totalorder %s70, %s72
    %p79 = scmp.eq.s32.totalorder %s15, 1
    %p80 = por %p78, %p79
    %p81 = scmp.ne.s32.totalorder %s72, %s73
    %p82 = scmp.eq.s32.totalorder %s15, 0
    %p83 = por %p81, %p82
    %p84 = scmp.ne.s32.totalorder %s72, %s73
    %p85 = scmp.eq.s32.totalorder %s16, 1
    %p86 = por %p84, %p85
    %p88 = scmp.ne.s32.totalorder %s73, %s87
    %p89 = scmp.eq.s32.totalorder %s16, 0
    %p90 = por %p88, %p89
    %s92 = sadd.s32 %s91, 1
    %p95 = scmp.eq.s32.totalorder %s10, 1
    %p96 = scmp.ne.s32.totalorder %s91, %s93
    %p97 = scmp.eq.s32.totalorder %s10, 0
    %p98 = por %p96, %p97
    %p99 = scmp.ne.s32.totalorder %s91, %s93
    %p100 = scmp.eq.s32.totalorder %s15, 1
    %p101 = por %p99, %p100
    %p102 = scmp.ne.s32.totalorder %s93, %s94
    %p103 = scmp.eq.s32.totalorder %s15, 0
    %p104 = por %p102, %p103
    %p105 = scmp.ne.s32.totalorder %s93, %s94
    %p106 = scmp.eq.s32.totalorder %s16, 1
    %p107 = por %p105, %p106
    %p109 = scmp.ne.s32.totalorder %s94, %s108
    %p110 = scmp.eq.s32.totalorder %s16, 0
    %p111 = por %p109, %p110
    %s112 = ssub.s32 %s10, %s17
    %p113 = scmp.eq.s32.totalorder %s112, 0
    %s115 = sadd.s32 %s114, 1
    %s116 = scalar_select %p113, %s114, %s115
    %p119 = pneg %p113
    %p120 = scmp.eq.s32.totalorder %s10, 1
    %p121 = por %p119, %p120
    %p122 = scmp.ne.s32.totalorder %s114, %s117
    %p123 = scmp.eq.s32.totalorder %s10, 0
    %p124 = por %p122, %p123
    %p125 = scmp.ne.s32.totalorder %s114, %s117
    %p126 = scmp.eq.s32.totalorder %s15, 1
    %p127 = por %p125, %p126
    %p128 = scmp.ne.s32.totalorder %s117, %s118
    %p129 = scmp.eq.s32.totalorder %s15, 0
    %p130 = por %p128, %p129
    %p131 = scmp.ne.s32.totalorder %s117, %s118
    %p132 = scmp.eq.s32.totalorder %s16, 1
    %p133 = por %p131, %p132
    %p135 = scmp.ne.s32.totalorder %s118, %s134
    %p136 = scmp.eq.s32.totalorder %s16, 0
    %p137 = por %p135, %p136
    %p138 = scmp.le.s32.totalorder 1, %s10
    %p139 = scmp.lt.s32.totalorder %s10, 3
    %p140 = pnand %p138, %p139
    %p141 = pneg %p140
    // Predicated region
    $region9: #{res_residual_block.5} parent=5 // pred_check
      _
    $region10: #{res_residual_block.5} parent=5 // pred_check_branch
      %143 = sbr.rel (%p140) target = $region12
    $region11: #{res_residual_block.5} parent=5 // pred_region
      %s144 = ssub.s32 %s10, 1
      // Predicated region
      $region13: #{res_residual_block.5} parent=11 // pred_check
        %p145 = pneg %p83
      $region14: #{res_residual_block.5} parent=11 // pred_check_branch
        %147 = sbr.rel (%p145) target = $region16
      $region15: #{res_residual_block.5} parent=11 // pred_region
        _
      $region16: #{res_residual_block.5} parent=11 // pred_fallthru
        _
      // Predicated region
      $region17: #{res_residual_block.5} parent=11 // pred_check
        %p148 = pneg %p104
      $region18: #{res_residual_block.5} parent=11 // pred_check_branch
        %150 = sbr.rel (%p148) target = $region20
      $region19: #{res_residual_block.5} parent=11 // pred_region
        _
      $region20: #{res_residual_block.5} parent=11 // pred_fallthru
        _
    $region12: #{res_residual_block.5} parent=5 // pred_fallthru
      _
    %p151 = scmp.lt.s32.totalorder %s10, 2
    // Predicated region
    $region21: #{res_residual_block.5} parent=5 // pred_check
      %p152 = pneg %p151
    $region22: #{res_residual_block.5} parent=5 // pred_check_branch
      %154 = sbr.rel (%p152) target = $region24
    $region23: #{res_residual_block.5} parent=5 // pred_region
      // Predicated region
      $region25: #{res_residual_block.5} parent=23 // pred_check
        %p155 = pneg %p30
      $region26: #{res_residual_block.5} parent=23 // pred_check_branch
        %157 = sbr.rel (%p155) target = $region28
      $region27: #{res_residual_block.5} parent=23 // pred_region
        %p158 = scmp.lt.s32.totalorder %s10, 1
        %s159 = scalar_select %p158, %s10, 1
        %s160 = smul.addr %s159, 2
        %s161 = smul.addr %s160, 8
        %s162 = scalar_lea.vmem %s0, %s161
      $region28: #{res_residual_block.5} parent=23 // pred_fallthru
        _
      // Predicated region
      $region29: #{res_residual_block.5} parent=23 // pred_check
        %p163 = pneg %p56
      $region30: #{res_residual_block.5} parent=23 // pred_check_branch
        %165 = sbr.rel (%p163) target = $region32
      $region31: #{res_residual_block.5} parent=23 // pred_region
        %p166 = scmp.lt.s32.totalorder %s10, 1
        %s167 = scalar_select %p166, %s10, 1
        %s168 = smul.addr %s167, 2
        %s169 = smul.addr %s168, 8
        %s170 = scalar_lea.vmem %s1, %s169
      $region32: #{res_residual_block.5} parent=23 // pred_fallthru
        _
    $region24: #{res_residual_block.5} parent=5 // pred_fallthru
      _
    %p171 = scmp.le.s32.totalorder 1, %s10
    %p172 = scmp.lt.s32.totalorder %s10, 3
    %p173 = pnand %p171, %p172
    %p174 = pneg %p173
    // Predicated region
    $region33: #{res_residual_block.5} parent=5 // pred_check
      _
    $region34: #{res_residual_block.5} parent=5 // pred_check_branch
      %176 = sbr.rel (%p173) target = $region36
    $region35: #{res_residual_block.5} parent=5 // pred_region
      %s177 = ssub.s32 %s10, 1
      %p178 = scmp.lt.s32.totalorder %s15, 1
      %s179 = scalar_select %p178, %s15, 1
      %s180 = smul.addr %s179, 2
      %s181 = smul.addr %s180, 8
      %s182 = scalar_lea.vmem %s0, %s181
      %p183 = pneg %p36
      %p184 = pneg %p33
      %p185 = scmp.lt.s32.totalorder %s15, 1
      %s186 = scalar_select %p185, %s15, 1
      %s187 = smul.addr %s186, 2
      %s188 = smul.addr %s187, 8
      %s189 = scalar_lea.vmem %s1, %s188
      %p190 = pneg %p62
      %p191 = pneg %p59
      %p192 = pneg %p83
      %p193 = pneg %p80
      %p194 = pneg %p104
      %p195 = pneg %p101
      %p196 = pneg %p130
      %p197 = pneg %p127
      %p198 = scmp.lt.s32.totalorder %s15, 1
      %s199 = scalar_select %p198, %s15, 1
      %s200 = smul.addr %s199, 2
      %s201 = smul.addr %s200, 8
      %s202 = scalar_lea.vmem %s4, %s201
      %p203 = scmp.lt.s32.totalorder %s15, 1
      %s204 = scalar_select %p203, %s15, 1
      %s205 = smul.addr %s204, 2
      %s206 = smul.addr %s205, 8
      %s207 = scalar_lea.vmem %s0, %s206
      %p208 = scmp.lt.s32.totalorder %s15, 1
      %s209 = scalar_select %p208, %s15, 1
      %s210 = smul.addr %s209, 2
      %s211 = smul.addr %s210, 8
      %s212 = scalar_lea.vmem %s1, %s211
      %p213 = scmp.lt.s32.totalorder %s15, 1
      %s214 = scalar_select %p213, %s15, 1
      %s215 = smul.addr %s214, 2
      %s216 = smul.addr %s215, 8
      %s217 = scalar_lea.vmem %s4, %s216
      %v218 = vld [vmem:[%s207] sm:$0xff]
      %v219 = vld [vmem:[%s207 + $0x8] sm:$0xff]
      %v220 = vld [vmem:[%s2] sm:$0xff]
      %222 = vset.pattern.permute.xlu0 0
      %223 = vperm.xlu0 %222, %v220
      %v224 = vpop.permute.xlu0 %223
      %v226 = vmul.f32 %v218, %v224
      %v227 = vmul.f32 %v219, %v224
      %v228 = vld [vmem:[%s3] sm:$0xff]
      %230 = vset.pattern.permute.xlu0 0
      %231 = vperm.xlu0 %230, %v228
      %v232 = vpop.permute.xlu0 %231
      %v234 = vadd.f32 %v226, %v232
      %v235 = vadd.f32 %v227, %v232
      %v236 = vld [vmem:[%s212] sm:$0xff]
      %v237 = vld [vmem:[%s212 + $0x8] sm:$0xff]
      %v238 = vmin.f32 %v234, 20.0
      %v239 = vmin.f32 %v235, 20.0
      %v240 = vmul.f32 %v238, 1.442695
      %v241 = vpow.pop %v240
      %v242 = vmul.f32 %v239, 1.442695
      %v243 = vpow.pop %v242
      %v244 = vadd.f32 %v241, 2.0
      %v245 = vadd.f32 %v243, 2.0
      %v246 = vmul.f32 %v241, %v244
      %v247 = vmul.f32 %v243, %v245
      %v248 = vmul.f32 %v234, %v246
      %v249 = vmul.f32 %v235, %v247
      %v250 = vadd.f32 %v246, 2.0
      %v251 = vadd.f32 %v247, 2.0
      %v252 = vrcp.pop %v250
      %v253 = vrcp.pop %v251
      %v254 = vmul.f32 %v248, %v252
      %v255 = vmul.f32 %v249, %v253
      %v256 = vadd.f32 %v236, %v254
      %v257 = vadd.f32 %v237, %v255
      %258 = vst [vmem:[%s217] sm:$0xff] %v256
      %259 = vst [vmem:[%s217 + $0x8] sm:$0xff] %v257
      %p260 = scmp.lt.s32.totalorder %s15, 1
      %s261 = scalar_select %p260, %s15, 1
      %s262 = smul.addr %s261, 2
      %s263 = smul.addr %s262, 8
      %s264 = scalar_lea.vmem %s4, %s263
      // Predicated region
      $region37: #{res_residual_block.5} parent=35 // pred_check
        %p265 = pneg %p127
      $region38: #{res_residual_block.5} parent=35 // pred_check_branch
        %267 = sbr.rel (%p265) target = $region40
      $region39: #{res_residual_block.5} parent=35 // pred_region
        _
      $region40: #{res_residual_block.5} parent=35 // pred_fallthru
        _
    $region36: #{res_residual_block.5} parent=5 // pred_fallthru
      _
    %p268 = scmp.le.s32.totalorder 2, %s10
    // Predicated region
    $region41: #{res_residual_block.5} parent=5 // pred_check
      %p269 = pneg %p268
    $region42: #{res_residual_block.5} parent=5 // pred_check_branch
      %271 = sbr.rel (%p269) target = $region44
    $region43: #{res_residual_block.5} parent=5 // pred_region
      %s272 = ssub.s32 %s10, 2
      // Predicated region
      $region45: #{res_residual_block.5} parent=43 // pred_check
        %p273 = pneg %p133
      $region46: #{res_residual_block.5} parent=43 // pred_check_branch
        %275 = sbr.rel (%p273) target = $region48
      $region47: #{res_residual_block.5} parent=43 // pred_region
        %p276 = scmp.lt.s32.totalorder %s16, 1
        %s277 = scalar_select %p276, %s16, 1
        %s278 = smul.addr %s277, 2
        %s279 = smul.addr %s278, 8
        %s280 = scalar_lea.vmem %s4, %s279
      $region48: #{res_residual_block.5} parent=43 // pred_fallthru
        _
    $region44: #{res_residual_block.5} parent=5 // pred_fallthru
      _
  $region6: #{res_residual_block.5} parent=0 // loop_footer
    %s14 = sadd.s32 1, %s10
  $region7: #{res_residual_block.5} parent=0 // loop_footer_branch
    %9 = sbr.rel target = $region3
  $region8: #{res_residual_block.5} parent=0 // loop_exit
    _

// kernel: res_residual_block.4
$region0: #{res_residual_block.4}
  #allocation0 [shape = 'u32[]', space=smem, size = 0x4, offset = 0x4, fixed_abs, tag = 'smem constant byte address 0x4 - core index']
  #allocation1 [shape = 'u32[144,128]{1,0:T(1,128)}', space=vmem, size = 0x12000, scoped, tag = 'internal scratch']
  %s0 = inlined_call_operand.vmem [shape: f32[2,4,256], index: 0, kind: input, shape index: {}]
  %s1 = inlined_call_operand.vmem [shape: f32[8,36], index: 1, kind: input, shape index: {}]
  %s2 = inlined_call_operand.vmem [shape: f32[4,1], index: 2, kind: input, shape index: {}]
  %s3 = inlined_call_operand.vmem [shape: f32[4,1], index: 3, kind: input, shape index: {}]
  %s4 = inlined_call_operand.vmem [shape: f32[2,8,256], index: 4, kind: output, shape index: {0}]
  %s5 = inlined_call_operand.vmem [shape: f32[2,8,1], index: 5, kind: output, shape index: {1}]
  %s6 = inlined_call_operand.vmem [shape: f32[2,8,1], index: 6, kind: output, shape index: {2}]
  %7 = xla_tuple %s4, %s5, %s6
  %s8 = sld [smem:[#allocation0]]
  $region65: #{res_residual_block.4} parent=0
    _
  %s10 = ssub.s32 1, %s8
  %s11 = scalar_select 0, %s10, %s8
  loop: start=0, step=1, limit=4
  $region2: #{res_residual_block.4} parent=0 // loop_pre_header
    _
  $region3: #{res_residual_block.4} parent=0 // loop_header
    %s13 = sphi 0, %s17
    %p14 = scmp.ge.s32.totalorder %s13, 4
    %s23 = sphi 0, %s25
    %s26 = sphi 0, %s23
    %s27 = sphi 0, %s26
    %s43 = sphi 0, %s27
    %s47 = sphi 0, %s47
    %s49 = sphi 0, %s47
    %s50 = sphi 0, %s49
    %s64 = sphi 0, %s50
    %s68 = sphi 0, %s68
    %s70 = sphi 0, %s68
    %s71 = sphi 0, %s70
    %s85 = sphi 0, %s71
    %s89 = sphi 0, %s89
    %s91 = sphi 0, %s89
    %s92 = sphi 0, %s91
    %s106 = sphi 0, %s92
    %s112 = sphi 0, %s114
    %s115 = sphi 0, %s112
    %s116 = sphi 0, %s115
    %s132 = sphi 0, %s116
    %s138 = sphi 0, %s140
    %s141 = sphi 0, %s138
    %s142 = sphi 0, %s141
    %s158 = sphi 0, %s142
    %s164 = sphi 0, %s166
    %s167 = sphi 0, %s164
    %s168 = sphi 0, %s167
    %s184 = sphi 0, %s168
  $region4: #{res_residual_block.4} parent=0 // loop_header_branch
    %16 = sbr.rel (%p14) target = $region8
  $region5: #{res_residual_block.4} parent=0 // loop_body
    %s18 = ssub.s32 %s13, 1
    %s19 = ssub.s32 %s13, 2
    %s20 = sadd.s32 %s13, 1
    %s21 = ssub.s32 %s13, %s20
    %p22 = scmp.eq.s32.totalorder %s21, 0
    %s24 = sadd.s32 %s23, 1
    %s25 = scalar_select %p22, %s23, %s24
    %p28 = pneg %p22
    %p29 = scmp.eq.s32.totalorder %s13, 1
    %p30 = por %p28, %p29
    %p31 = scmp.ne.s32.totalorder %s23, %s26
    %p32 = scmp.eq.s32.totalorder %s13, 0
    %p33 = por %p31, %p32
    %p34 = scmp.ne.s32.totalorder %s23, %s26
    %p35 = scmp.eq.s32.totalorder %s18, 1
    %p36 = por %p34, %p35
    %p37 = scmp.ne.s32.totalorder %s26, %s27
    %p38 = scmp.eq.s32.totalorder %s18, 0
    %p39 = por %p37, %p38
    %p40 = scmp.ne.s32.totalorder %s26, %s27
    %p41 = scmp.eq.s32.totalorder %s19, 1
    %p42 = por %p40, %p41
    %p44 = scmp.ne.s32.totalorder %s27, %s43
    %p45 = scmp.eq.s32.totalorder %s19, 0
    %p46 = por %p44, %p45
    %s48 = sadd.s32 %s47, 1
    %p51 = scmp.eq.s32.totalorder %s13, 1
    %p52 = scmp.ne.s32.totalorder %s47, %s49
    %p53 = scmp.eq.s32.totalorder %s13, 0
    %p54 = por %p52, %p53
    %p55 = scmp.ne.s32.totalorder %s47, %s49
    %p56 = scmp.eq.s32.totalorder %s18, 1
    %p57 = por %p55, %p56
    %p58 = scmp.ne.s32.totalorder %s49, %s50
    %p59 = scmp.eq.s32.totalorder %s18, 0
    %p60 = por %p58, %p59
    %p61 = scmp.ne.s32.totalorder %s49, %s50
    %p62 = scmp.eq.s32.totalorder %s19, 1
    %p63 = por %p61, %p62
    %p65 = scmp.ne.s32.totalorder %s50, %s64
    %p66 = scmp.eq.s32.totalorder %s19, 0
    %p67 = por %p65, %p66
    %s69 = sadd.s32 %s68, 1
    %p72 = scmp.eq.s32.totalorder %s13, 1
    %p73 = scmp.ne.s32.totalorder %s68, %s70
    %p74 = scmp.eq.s32.totalorder %s13, 0
    %p75 = por %p73, %p74
    %p76 = scmp.ne.s32.totalorder %s68, %s70
    %p77 = scmp.eq.s32.totalorder %s18, 1
    %p78 = por %p76, %p77
    %p79 = scmp.ne.s32.totalorder %s70, %s71
    %p80 = scmp.eq.s32.totalorder %s18, 0
    %p81 = por %p79, %p80
    %p82 = scmp.ne.s32.totalorder %s70, %s71
    %p83 = scmp.eq.s32.totalorder %s19, 1
    %p84 = por %p82, %p83
    %p86 = scmp.ne.s32.totalorder %s71, %s85
    %p87 = scmp.eq.s32.totalorder %s19, 0
    %p88 = por %p86, %p87
    %s90 = sadd.s32 %s89, 1
    %p93 = scmp.eq.s32.totalorder %s13, 1
    %p94 = scmp.ne.s32.totalorder %s89, %s91
    %p95 = scmp.eq.s32.totalorder %s13, 0
    %p96 = por %p94, %p95
    %p97 = scmp.ne.s32.totalorder %s89, %s91
    %p98 = scmp.eq.s32.totalorder %s18, 1
    %p99 = por %p97, %p98
    %p100 = scmp.ne.s32.totalorder %s91, %s92
    %p101 = scmp.eq.s32.totalorder %s18, 0
    %p102 = por %p100, %p101
    %p103 = scmp.ne.s32.totalorder %s91, %s92
    %p104 = scmp.eq.s32.totalorder %s19, 1
    %p105 = por %p103, %p104
    %p107 = scmp.ne.s32.totalorder %s92, %s106
    %p108 = scmp.eq.s32.totalorder %s19, 0
    %p109 = por %p107, %p108
    %s110 = ssub.s32 %s13, %s20
    %p111 = scmp.eq.s32.totalorder %s110, 0
    %s113 = sadd.s32 %s112, 1
    %s114 = scalar_select %p111, %s112, %s113
    %p117 = pneg %p111
    %p118 = scmp.eq.s32.totalorder %s13, 1
    %p119 = por %p117, %p118
    %p120 = scmp.ne.s32.totalorder %s112, %s115
    %p121 = scmp.eq.s32.totalorder %s13, 0
    %p122 = por %p120, %p121
    %p123 = scmp.ne.s32.totalorder %s112, %s115
    %p124 = scmp.eq.s32.totalorder %s18, 1
    %p125 = por %p123, %p124
    %p126 = scmp.ne.s32.totalorder %s115, %s116
    %p127 = scmp.eq.s32.totalorder %s18, 0
    %p128 = por %p126, %p127
    %p129 = scmp.ne.s32.totalorder %s115, %s116
    %p130 = scmp.eq.s32.totalorder %s19, 1
    %p131 = por %p129, %p130
    %p133 = scmp.ne.s32.totalorder %s116, %s132
    %p134 = scmp.eq.s32.totalorder %s19, 0
    %p135 = por %p133, %p134
    %s136 = ssub.s32 %s13, %s20
    %p137 = scmp.eq.s32.totalorder %s136, 0
    %s139 = sadd.s32 %s138, 1
    %s140 = scalar_select %p137, %s138, %s139
    %p143 = pneg %p137
    %p144 = scmp.eq.s32.totalorder %s13, 1
    %p145 = por %p143, %p144
    %p146 = scmp.ne.s32.totalorder %s138, %s141
    %p147 = scmp.eq.s32.totalorder %s13, 0
    %p148 = por %p146, %p147
    %p149 = scmp.ne.s32.totalorder %s138, %s141
    %p150 = scmp.eq.s32.totalorder %s18, 1
    %p151 = por %p149, %p150
    %p152 = scmp.ne.s32.totalorder %s141, %s142
    %p153 = scmp.eq.s32.totalorder %s18, 0
    %p154 = por %p152, %p153
    %p155 = scmp.ne.s32.totalorder %s141, %s142
    %p156 = scmp.eq.s32.totalorder %s19, 1
    %p157 = por %p155, %p156
    %p159 = scmp.ne.s32.totalorder %s142, %s158
    %p160 = scmp.eq.s32.totalorder %s19, 0
    %p161 = por %p159, %p160
    %s162 = ssub.s32 %s13, %s20
    %p163 = scmp.eq.s32.totalorder %s162, 0
    %s165 = sadd.s32 %s164, 1
    %s166 = scalar_select %p163, %s164, %s165
    %p169 = pneg %p163
    %p170 = scmp.eq.s32.totalorder %s13, 1
    %p171 = por %p169, %p170
    %p172 = scmp.ne.s32.totalorder %s164, %s167
    %p173 = scmp.eq.s32.totalorder %s13, 0
    %p174 = por %p172, %p173
    %p175 = scmp.ne.s32.totalorder %s164, %s167
    %p176 = scmp.eq.s32.totalorder %s18, 1
    %p177 = por %p175, %p176
    %p178 = scmp.ne.s32.totalorder %s167, %s168
    %p179 = scmp.eq.s32.totalorder %s18, 0
    %p180 = por %p178, %p179
    %p181 = scmp.ne.s32.totalorder %s167, %s168
    %p182 = scmp.eq.s32.totalorder %s19, 1
    %p183 = por %p181, %p182
    %p185 = scmp.ne.s32.totalorder %s168, %s184
    %p186 = scmp.eq.s32.totalorder %s19, 0
    %p187 = por %p185, %p186
    %p188 = scmp.le.s32.totalorder 1, %s13
    %p189 = scmp.lt.s32.totalorder %s13, 3
    %p190 = pnand %p188, %p189
    %p191 = pneg %p190
    // Predicated region
    $region9: #{res_residual_block.4} parent=5 // pred_check
      _
    $region10: #{res_residual_block.4} parent=5 // pred_check_branch
      %193 = sbr.rel (%p190) target = $region12
    $region11: #{res_residual_block.4} parent=5 // pred_region
      %s194 = ssub.s32 %s13, 1
      // Predicated region
      $region13: #{res_residual_block.4} parent=11 // pred_check
        %p195 = pneg %p60
      $region14: #{res_residual_block.4} parent=11 // pred_check_branch
        %197 = sbr.rel (%p195) target = $region16
      $region15: #{res_residual_block.4} parent=11 // pred_region
        _
      $region16: #{res_residual_block.4} parent=11 // pred_fallthru
        _
      // Predicated region
      $region17: #{res_residual_block.4} parent=11 // pred_check
        %p198 = pneg %p81
      $region18: #{res_residual_block.4} parent=11 // pred_check_branch
        %200 = sbr.rel (%p198) target = $region20
      $region19: #{res_residual_block.4} parent=11 // pred_region
        _
      $region20: #{res_residual_block.4} parent=11 // pred_fallthru
        _
      // Predicated region
      $region21: #{res_residual_block.4} parent=11 // pred_check
        %p201 = pneg %p102
      $region22: #{res_residual_block.4} parent=11 // pred_check_branch
        %203 = sbr.rel (%p201) target = $region24
      $region23: #{res_residual_block.4} parent=11 // pred_region
        _
      $region24: #{res_residual_block.4} parent=11 // pred_fallthru
        _
    $region12: #{res_residual_block.4} parent=5 // pred_fallthru
      _
    %p204 = scmp.lt.s32.totalorder %s13, 2
    // Predicated region
    $region25: #{res_residual_block.4} parent=5 // pred_check
      %p205 = pneg %p204
    $region26: #{res_residual_block.4} parent=5 // pred_check_branch
      %207 = sbr.rel (%p205) target = $region28
    $region27: #{res_residual_block.4} parent=5 // pred_region
      // Predicated region
      $region29: #{res_residual_block.4} parent=27 // pred_check
        %p208 = pneg %p33
      $region30: #{res_residual_block.4} parent=27 // pred_check_branch
        %210 = sbr.rel (%p208) target = $region32
      $region31: #{res_residual_block.4} parent=27 // pred_region
        %p211 = scmp.lt.s32.totalorder %s13, 1
        %s212 = scalar_select %p211, %s13, 1
        %s213 = smul.addr %s212, 2
        %s214 = smul.addr %s213, 4
        %s215 = scalar_lea.vmem %s0, %s214
      $region32: #{res_residual_block.4} parent=27 // pred_fallthru
        _
    $region28: #{res_residual_block.4} parent=5 // pred_fallthru
      _
    %p216 = scmp.le.s32.totalorder 1, %s13
    %p217 = scmp.lt.s32.totalorder %s13, 3
    %p218 = pnand %p216, %p217
    %p219 = pneg %p218
    // Predicated region
    $region33: #{res_residual_block.4} parent=5 // pred_check
      _
    $region34: #{res_residual_block.4} parent=5 // pred_check_branch
      %221 = sbr.rel (%p218) target = $region36
    $region35: #{res_residual_block.4} parent=5 // pred_region
      %s222 = ssub.s32 %s13, 1
      %p223 = scmp.lt.s32.totalorder %s18, 1
      %s224 = scalar_select %p223, %s18, 1
      %s225 = smul.addr %s224, 2
      %s226 = smul.addr %s225, 4
      %s227 = scalar_lea.vmem %s0, %s226
      %p228 = pneg %p39
      %p229 = pneg %p36
      %p230 = pneg %p60
      %p231 = pneg %p57
      %p232 = pneg %p81
      %p233 = pneg %p78
      %p234 = pneg %p102
      %p235 = pneg %p99
      %p236 = pneg %p128
      %p237 = pneg %p125
      %p238 = scmp.lt.s32.totalorder %s18, 1
      %s239 = scalar_select %p238, %s18, 1
      %s240 = smul.addr %s239, 2
      %s241 = smul.addr %s240, 8
      %s242 = scalar_lea.vmem %s4, %s241
      %p243 = pneg %p154
      %p244 = pneg %p151
      %p245 = scmp.lt.s32.totalorder %s18, 1
      %s246 = scalar_select %p245, %s18, 1
      %s247 = smul.addr %s246, 8
      %s248 = scalar_lea.vmem %s5, %s247
      %p249 = pneg %p180
      %p250 = pneg %p177
      %p251 = scmp.lt.s32.totalorder %s18, 1
      %s252 = scalar_select %p251, %s18, 1
      %s253 = smul.addr %s252, 8
      %s254 = scalar_lea.vmem %s6, %s253
      %p255 = scmp.lt.s32.totalorder %s18, 1
      %s256 = scalar_select %p255, %s18, 1
      %s257 = smul.addr %s256, 2
      %s258 = smul.addr %s257, 4
      %s259 = scalar_lea.vmem %s0, %s258
      %p260 = scmp.lt.s32.totalorder %s18, 1
      %s261 = scalar_select %p260, %s18, 1
      %s262 = smul.addr %s261, 2
      %s263 = smul.addr %s262, 8
      %s264 = scalar_lea.vmem %s4, %s263
      %p265 = scmp.lt.s32.totalorder %s18, 1
      %s266 = scalar_select %p265, %s18, 1
      %s267 = smul.addr %s266, 8
      %s268 = scalar_lea.vmem %s5, %s267
      %p269 = scmp.lt.s32.totalorder %s18, 1
      %s270 = scalar_select %p269, %s18, 1
      %s271 = smul.addr %s270, 8
      %s272 = scalar_lea.vmem %s6, %s271
      %v273 = vld [vmem:[%s259] sm:$0xff]
      %v274 = vld [vmem:[%s2] sm:$0xf]
      %276 = vset.pattern.permute.xlu0 0
      %277 = vperm.xlu0 %276, %v274
      %v278 = vpop.permute.xlu0 %277
      %v280 = vunpack.c.l.s4 839922192
      %v281 = vunpack.c.0.s8 %v280
      %v282 = vlaneseq
      %v283 = vshrl.u32 %v282, 7
      %v284 = vsub.s32 %v281, %v283
      %v285 = vrot.slane %v278, %v284
      %v287 = vmul.f32 %v273, %v285
      %v288 = vld [vmem:[%s3] sm:$0xf]
      %290 = vset.pattern.permute.xlu0 0
      %291 = vperm.xlu0 %290, %v288
      %v292 = vpop.permute.xlu0 %291
      %v294 = vunpack.c.l.s4 839922192
      %v295 = vunpack.c.0.s8 %v294
      %v296 = vlaneseq
      %v297 = vshrl.u32 %v296, 7
      %v298 = vsub.s32 %v295, %v297
      %v299 = vrot.slane %v292, %v298
      %v301 = vadd.f32 %v287, %v299
      %v302 = vmin.f32 %v301, 20.0
      %v303 = vmul.f32 %v302, 1.442695
      %v304 = vpow.pop %v303
      %v305 = vadd.f32 %v304, 2.0
      %v306 = vmul.f32 %v304, %v305
      %v307 = vmul.f32 %v301, %v306
      %v308 = vadd.f32 %v306, 2.0
      %v309 = vrcp.pop %v308
      %v310 = vmul.f32 %v307, %v309
      %v312 = vcombine.high %v310, %v310
      %313 = vrot.lane.b32.xlu0 %v310, 17
      %v314 = vpop.permute.xlu0 %313
      %315 = vrot.lane.b32.xlu0 %v312, 17
      %v316 = vpop.permute.xlu0 %315
      %vm317 = vcmask 138240
      %v318 = vsel %vm317, %v314, %v316
      %v322 = vsel %vm317, 0.0, %v314
      %v323 = vsel %vm317, %v316, 0.0
      %v324 = vlaneseq
      %v325 = vand.u32 %v324, 127
      %v326 = vadd.s32 %v325, 128
      %vm327 = vcmp.lt.s32.totalorder %v325, 0
      %v328 = vsub.s32 0, %v325
      %v329 = vsel %vm327, %v328, %v325
      %v330 = vshrl.u32 %v329, 4
      %v331 = vand.u32 %v329, 15
      %v332 = vsub.s32 0, %v331
      %v333 = vsel %vm327, %v332, %v331
      %vm334 = vcmp.lt.s32.totalorder %v326, 0
      %v335 = vsub.s32 0, %v326
      %v336 = vsel %vm334, %v335, %v326
      %v337 = vshrl.u32 %v336, 4
      %v338 = vand.u32 %v336, 15
      %v339 = vsub.s32 0, %v338
      %v340 = vsel %vm334, %v339, %v338
      %vm341 = vcmp.ne.s32.totalorder %v333, 0
      %vm342 = vcmp.ne.s32.totalorder %v340, 0
      %vm343 = vcmp.lt.s32.totalorder %v333, 0
      %vm344 = vcmp.lt.s32.totalorder %v340, 0
      %vm345 = vmand %vm343, %vm341
      %vm346 = vmand %vm344, %vm342
      %v347 = vadd.s32 %v333, 16
      %v348 = vadd.s32 %v340, 16
      %v349 = vsel %vm345, %v347, %v333
      %v350 = vsel %vm346, %v348, %v340
      %vm351 = vcmp.ne.s32.totalorder %v349, 0
      %vm352 = vcmp.ne.s32.totalorder %v350, 0
      %vm353 = vcmp.ne.s32.totalorder %v349, 15
      %vm354 = vcmp.ne.s32.totalorder %v350, 15
      %vm355 = vcmp.ge.s32.totalorder %v325, 16
      %vm356 = vcmp.ge.s32.totalorder %v326, 16
      %vm357 = vcmp.lt.s32.totalorder %v325, 240
      %vm358 = vcmp.lt.s32.totalorder %v326, 240
      %v359 = vsel %vm355, %v322, 0.0
      %v360 = vsel %vm356, %v318, 0.0
      %v361 = vsel %vm351, %v359, 0.0
      %v362 = vsel %vm352, %v360, 0.0
      %365 = vrot.lane.b32.xlu0 %v322, 127
      %v366 = vpop.permute.xlu0 %365
      %367 = vrot.lane.b32.xlu0 %v318, 127
      %v368 = vpop.permute.xlu0 %367
      %369 = vrot.lane.b32.xlu0 %v323, 127
      %v370 = vpop.permute.xlu0 %369
      %vm371 = vcmask 1039360
      %v372 = vsel %vm371, %v366, %v368
      %v373 = vsel %vm371, %v368, %v370
      %v376 = vsel %vm355, %v372, 0.0
      %v377 = vsel %vm356, %v373, 0.0
      %378 = vrot.lane.b32.xlu0 %v322, 126
      %v379 = vpop.permute.xlu0 %378
      %380 = vrot.lane.b32.xlu0 %v318, 126
      %v381 = vpop.permute.xlu0 %380
      %382 = vrot.lane.b32.xlu0 %v323, 126
      %v383 = vpop.permute.xlu0 %382
      %vm384 = vcmask 1031168
      %v385 = vsel %vm384, %v379, %v381
      %v386 = vsel %vm384, %v381, %v383
      %v389 = vsel %vm355, %v385, 0.0
      %v390 = vsel %vm356, %v386, 0.0
      %v391 = vsel %vm353, %v389, 0.0
      %v392 = vsel %vm354, %v390, 0.0
      %393 = vrot.lane.b32.xlu0 %v322, 112
      %v394 = vpop.permute.xlu0 %393
      %395 = vrot.lane.b32.xlu0 %v318, 112
      %v396 = vpop.permute.xlu0 %395
      %397 = vrot.lane.b32.xlu0 %v323, 112
      %v398 = vpop.permute.xlu0 %397
      %vm399 = vcmask 916480
      %v400 = vsel %vm399, %v394, %v396
      %v401 = vsel %vm399, %v396, %v398
      %v404 = vsel %vm351, %v400, 0.0
      %v405 = vsel %vm352, %v401, 0.0
      %406 = vrot.lane.b32.xlu0 %v322, 110
      %v407 = vpop.permute.xlu0 %406
      %408 = vrot.lane.b32.xlu0 %v318, 110
      %v409 = vpop.permute.xlu0 %408
      %410 = vrot.lane.b32.xlu0 %v323, 110
      %v411 = vpop.permute.xlu0 %410
      %vm412 = vcmask 900096
      %v413 = vsel %vm412, %v407, %v409
      %v414 = vsel %vm412, %v409, %v411
      %v417 = vsel %vm353, %v413, 0.0
      %v418 = vsel %vm354, %v414, 0.0
      %419 = vrot.lane.b32.xlu0 %v322, 96
      %v420 = vpop.permute.xlu0 %419
      %421 = vrot.lane.b32.xlu0 %v318, 96
      %v422 = vpop.permute.xlu0 %421
      %423 = vrot.lane.b32.xlu0 %v323, 96
      %v424 = vpop.permute.xlu0 %423
      %vm425 = vcmask 785408
      %v426 = vsel %vm425, %v420, %v422
      %v427 = vsel %vm425, %v422, %v424
      %v430 = vsel %vm357, %v426, 0.0
      %v431 = vsel %vm358, %v427, 0.0
      %v432 = vsel %vm351, %v430, 0.0
      %v433 = vsel %vm352, %v431, 0.0
      %434 = vrot.lane.b32.xlu0 %v322, 95
      %v435 = vpop.permute.xlu0 %434
      %436 = vrot.lane.b32.xlu0 %v318, 95
      %v437 = vpop.permute.xlu0 %436
      %438 = vrot.lane.b32.xlu0 %v323, 95
      %v439 = vpop.permute.xlu0 %438
      %vm440 = vcmask 777216
      %v441 = vsel %vm440, %v435, %v437
      %v442 = vsel %vm440, %v437, %v439
      %v445 = vsel %vm357, %v441, 0.0
      %v446 = vsel %vm358, %v442, 0.0
      %447 = vrot.lane.b32.xlu0 %v322, 94
      %v448 = vpop.permute.xlu0 %447
      %449 = vrot.lane.b32.xlu0 %v318, 94
      %v450 = vpop.permute.xlu0 %449
      %451 = vrot.lane.b32.xlu0 %v323, 94
      %v452 = vpop.permute.xlu0 %451
      %vm453 = vcmask 769024
      %v454 = vsel %vm453, %v448, %v450
      %v455 = vsel %vm453, %v450, %v452
      %v458 = vsel %vm357, %v454, 0.0
      %v459 = vsel %vm358, %v455, 0.0
      %v460 = vsel %vm353, %v458, 0.0
      %v461 = vsel %vm354, %v459, 0.0
      %v464 = vrot.slane %v376, 4
      %v465 = vrot.slane %v377, 4
      %v470 = vrot.slane %v404, 4
      %v471 = vrot.slane %v405, 4
      %474 = vrot.lane.b32.xlu0 %v322, 111
      %v475 = vpop.permute.xlu0 %474
      %476 = vrot.lane.b32.xlu0 %v318, 111
      %v477 = vpop.permute.xlu0 %476
      %478 = vrot.lane.b32.xlu0 %v323, 111
      %v479 = vpop.permute.xlu0 %478
      %vm480 = vcmask 908288
      %v481 = vsel %vm480, %v475, %v477
      %v482 = vsel %vm480, %v477, %v479
      %v487 = vrot.slane %v417, 4
      %v488 = vrot.slane %v418, 4
      %v493 = vrot.slane %v445, 4
      %v494 = vrot.slane %v446, 4
      %vm497 = vcmask 1043456
      %v498 = vsel %vm497, %v361, %v464
      %v499 = vsel %vm497, %v362, %v465
      %v500 = vsel %vm497, %v391, %v470
      %v501 = vsel %vm497, %v392, %v471
      %v502 = vsel %vm497, %v481, %v487
      %v503 = vsel %vm497, %v482, %v488
      %v504 = vsel %vm497, %v432, %v493
      %v505 = vsel %vm497, %v433, %v494
      %v506 = vld [vmem:[%s1] sm:$0xff]
      %vm507 = vcmask 293888
      %v509 = vsel %vm507, %v506, 0
      %v512 = vsel %vm497, %v460, 0
      %v515 = vsel %vm497, %v461, 0
      %517 = vmatprep.subr.mxu0 0.0
      %518 = vmatpush1.msra.mxu0 0.0
      %519 = vmatprep.subr.mxu0 0.0
      %520 = vmatpush1.msra.mxu0 0.0
      %521 = vmatprep.subr.mxu0 0.0
      %522 = vmatpush1.msra.mxu0 0.0
      %523 = vmatprep.subr.mxu0 0.0
      %524 = vmatpush1.msra.mxu0 0.0
      %525 = vmatprep.subr.mxu0 0.0
      %526 = vmatpush1.msra.mxu0 0.0
      %527 = vmatprep.subr.mxu0 0.0
      %528 = vmatpush1.msra.mxu0 0.0
      %529 = vmatprep.subr.mxu0 0.0
      %530 = vmatpush1.msra.mxu0 0.0
      %531 = vmatprep.subr.mxu0 0.0
      %532 = vmatpush1.msra.mxu0 0.0
      %533 = vmatprep.subr.mxu0 0.0
      %534 = vmatpush1.msra.mxu0 0.0
      %535 = vmatprep.subr.mxu0 0.0
      %536 = vmatpush1.msra.mxu0 0.0
      %537 = vmatprep.subr.mxu0 0.0
      %538 = vmatpush1.msra.mxu0 0.0
      %539 = vmatprep.subr.mxu0 %v515
      %540 = vmatpush1.msra.mxu0 %v512
      %541 = vmatprep.subr.mxu0 %v505
      %542 = vmatpush1.msra.mxu0 %v504
      %543 = vmatprep.subr.mxu0 %v503
      %544 = vmatpush1.msra.mxu0 %v502
      %545 = vmatprep.subr.mxu0 %v501
      %546 = vmatpush1.msra.mxu0 %v500
      %547 = vmatprep.subr.mxu0 %v499
      %548 = vmatpush1.msra.mxu0 %v498
      %549 = vmatprep.subr.mxu0 0.0
      %550 = vmatpush2.msra.mxu0 0.0
      %551 = vmatprep.subr.mxu0 0.0
      %552 = vmatpush2.msra.mxu0 0.0
      %553 = vmatprep.subr.mxu0 0.0
      %554 = vmatpush2.msra.mxu0 0.0
      %555 = vmatprep.subr.mxu0 0.0
      %556 = vmatpush2.msra.mxu0 0.0
      %557 = vmatprep.subr.mxu0 0.0
      %558 = vmatpush2.msra.mxu0 0.0
      %559 = vmatprep.subr.mxu0 0.0
      %560 = vmatpush2.msra.mxu0 0.0
      %561 = vmatprep.subr.mxu0 0.0
      %562 = vmatpush2.msra.mxu0 0.0
      %563 = vmatprep.subr.mxu0 0.0
      %564 = vmatpush2.msra.mxu0 0.0
      %565 = vmatprep.subr.mxu0 0.0
      %566 = vmatpush2.msra.mxu0 0.0
      %567 = vmatprep.subr.mxu0 0.0
      %568 = vmatpush2.msra.mxu0 0.0
      %569 = vmatprep.subr.mxu0 0.0
      %570 = vmatpush2.msra.mxu0 0.0
      %571 = vmatprep.subr.mxu0 0.0
      %572 = vmatpush2.msra.mxu0 0.0
      %573 = vmatprep.subr.mxu0 0.0
      %574 = vmatpush2.msra.mxu0 0.0
      %575 = vmatprep.subr.mxu0 0.0
      %576 = vmatpush2.msra.mxu0 0.0
      %577 = vmatprep.subr.mxu0 0.0
      %578 = vmatpush2.msra.mxu0 0.0
      %579 = vmatprep.subr.mxu0 0.0
      %580 = vmatpush2.msra.mxu0 0.0
      %581 = vmatprep.mubr.f32.mxu0 0.0
      %582 = vmatmul.mubr.f32.gmra.mxu0 %v509
      %v583 = vpop.f32.mrf.mxu0
      %v584 = vadd.f32 0.0, %v583
      %v585 = vpop.f32.mrf.mxu0
      %v586 = vadd.f32 0.0, %v585
      %587 = vdwg.mxu0
      %588 = vst [vmem:[%s264] sm:$0xff] %v584
      %589 = vst [vmem:[%s264 + $0x8] sm:$0xff] %v586
      %v590 = vadd.f32 %v584, %v586
      %591 = vadd.xlane.f32.xlu0 %v590
      %v592 = vpop.xlane.xlu0 %591
      %vm593 = vcmask 7168
      %594 = vst.msk [vmem:[%s268] sm:$0xff] %vm593, %v592
      %v595 = vmul.f32 %v584, %v584
      %v596 = vmul.f32 %v586, %v586
      %v597 = vadd.f32 %v595, %v596
      %598 = vadd.xlane.f32.xlu0 %v597
      %v599 = vpop.xlane.xlu0 %598
      %600 = vst.msk [vmem:[%s272] sm:$0xff] %vm593, %v599
      %p601 = scmp.lt.s32.totalorder %s18, 1
      %s602 = scalar_select %p601, %s18, 1
      %s603 = smul.addr %s602, 2
      %s604 = smul.addr %s603, 8
      %s605 = scalar_lea.vmem %s4, %s604
      %p606 = scmp.lt.s32.totalorder %s18, 1
      %s607 = scalar_select %p606, %s18, 1
      %s608 = smul.addr %s607, 8
      %s609 = scalar_lea.vmem %s5, %s608
      %p610 = scmp.lt.s32.totalorder %s18, 1
      %s611 = scalar_select %p610, %s18, 1
      %s612 = smul.addr %s611, 8
      %s613 = scalar_lea.vmem %s6, %s612
      // Predicated region
      $region37: #{res_residual_block.4} parent=35 // pred_check
        %p614 = pneg %p125
      $region38: #{res_residual_block.4} parent=35 // pred_check_branch
        %616 = sbr.rel (%p614) target = $region40
      $region39: #{res_residual_block.4} parent=35 // pred_region
        _
      $region40: #{res_residual_block.4} parent=35 // pred_fallthru
        _
      // Predicated region
      $region41: #{res_residual_block.4} parent=35 // pred_check
        %p617 = pneg %p151
      $region42: #{res_residual_block.4} parent=35 // pred_check_branch
        %619 = sbr.rel (%p617) target = $region44
      $region43: #{res_residual_block.4} parent=35 // pred_region
        _
      $region44: #{res_residual_block.4} parent=35 // pred_fallthru
        _
      // Predicated region
      $region45: #{res_residual_block.4} parent=35 // pred_check
        %p620 = pneg %p177
      $region46: #{res_residual_block.4} parent=35 // pred_check_branch
        %622 = sbr.rel (%p620) target = $region48
      $region47: #{res_residual_block.4} parent=35 // pred_region
        _
      $region48: #{res_residual_block.4} parent=35 // pred_fallthru
        _
    $region36: #{res_residual_block.4} parent=5 // pred_fallthru
      _
    %p623 = scmp.le.s32.totalorder 2, %s13
    // Predicated region
    $region49: #{res_residual_block.4} parent=5 // pred_check
      %p624 = pneg %p623
    $region50: #{res_residual_block.4} parent=5 // pred_check_branch
      %626 = sbr.rel (%p624) target = $region52
    $region51: #{res_residual_block.4} parent=5 // pred_region
      %s627 = ssub.s32 %s13, 2
      // Predicated region
      $region53: #{res_residual_block.4} parent=51 // pred_check
        %p628 = pneg %p131
      $region54: #{res_residual_block.4} parent=51 // pred_check_branch
        %630 = sbr.rel (%p628) target = $region56
      $region55: #{res_residual_block.4} parent=51 // pred_region
        %p631 = scmp.lt.s32.totalorder %s19, 1
        %s632 = scalar_select %p631, %s19, 1
        %s633 = smul.addr %s632, 2
        %s634 = smul.addr %s633, 8
        %s635 = scalar_lea.vmem %s4, %s634
      $region56: #{res_residual_block.4} parent=51 // pred_fallthru
        _
      // Predicated region
      $region57: #{res_residual_block.4} parent=51 // pred_check
        %p636 = pneg %p157
      $region58: #{res_residual_block.4} parent=51 // pred_check_branch
        %638 = sbr.rel (%p636) target = $region60
      $region59: #{res_residual_block.4} parent=51 // pred_region
        %p639 = scmp.lt.s32.totalorder %s19, 1
        %s640 = scalar_select %p639, %s19, 1
        %s641 = smul.addr %s640, 8
        %s642 = scalar_lea.vmem %s5, %s641
      $region60: #{res_residual_block.4} parent=51 // pred_fallthru
        _
      // Predicated region
      $region61: #{res_residual_block.4} parent=51 // pred_check
        %p643 = pneg %p183
      $region62: #{res_residual_block.4} parent=51 // pred_check_branch
        %645 = sbr.rel (%p643) target = $region64
      $region63: #{res_residual_block.4} parent=51 // pred_region
        %p646 = scmp.lt.s32.totalorder %s19, 1
        %s647 = scalar_select %p646, %s19, 1
        %s648 = smul.addr %s647, 8
        %s649 = scalar_lea.vmem %s6, %s648
      $region64: #{res_residual_block.4} parent=51 // pred_fallthru
        _
    $region52: #{res_residual_block.4} parent=5 // pred_fallthru
      _
  $region6: #{res_residual_block.4} parent=0 // loop_footer
    %s17 = sadd.s32 1, %s13
  $region7: #{res_residual_block.4} parent=0 // loop_footer_branch
    %12 = sbr.rel target = $region3
  $region8: #{res_residual_block.4} parent=0 // loop_exit
    _

</llo_original>
